<compile_context>
chip_gen: v7x
topology: tpu7x:2x2x1
jax: 0.10.0
libtpu: 0.0.40
codegen_flags: <defaults>
</compile_context>

<pallas_src>
import functools

import numpy as np
import jax
import jax.numpy as jnp
from jax.experimental import pallas as pl
from jax.experimental.pallas import tpu as pltpu


def _round_up(a, b):
    return (a + b - 1) // b * b


# ----------------------------------------------------------------------------
# Pallas kernel: one (batch, spatial-tile) block of the fused bottleneck.
#   x block   : (C0, TS) bf16 -- channels on sublanes, spatial on lanes
#   wa/ba     : stacked [conv1; shortcut] folded weights (c1p+c3, c0) / bias
#   w2/b2,w3/b3: folded conv2 / conv3 weights and biases
# ----------------------------------------------------------------------------
def _conv_block_kernel(x_ref, wa_ref, ba_ref, w2_ref, b2_ref, w3_ref, b3_ref,
                       o_ref, *, c1p, is_relu):
    def act(v):
        if is_relu:
            return jnp.maximum(v, 0.0)
        return jnp.where(v >= 0.0, v, 0.2 * v)          # LeakyReLU(0.2)

    x = x_ref[...]                                       # (c0, ts) bf16
    # One stacked MXU pass computes conv1 and the shortcut conv (shared RHS x).
    ha = (jnp.dot(wa_ref[...], x, preferred_element_type=jnp.float32)
          + ba_ref[...])                                 # (c1p + c3, ts) f32
    h1 = act(ha[:c1p, :])                                # (c1p, ts)  conv1 out
    sc = ha[c1p:, :]                                     # (c3,  ts)  shortcut
    h2 = act(jnp.dot(w2_ref[...], h1.astype(w2_ref.dtype),
                     preferred_element_type=jnp.float32) + b2_ref[...])
    h3 = (jnp.dot(w3_ref[...], h2.astype(w3_ref.dtype),
                  preferred_element_type=jnp.float32) + b3_ref[...])
    o_ref[...] = act(h3 + sc).astype(o_ref.dtype)


# ----------------------------------------------------------------------------
# Wrapper helpers
# ----------------------------------------------------------------------------
def _fold_conv_bn(w, bn, norm, eps=1e-5):
    """Fold eval-mode BatchNorm into a 1x1-conv weight -> (W', bias[:, None])."""
    w = jnp.asarray(w, jnp.float32)
    c_out = w.shape[0]
    if not norm or bn is None:
        return w, jnp.zeros((c_out, 1), jnp.float32)
    inv = bn["gamma"] / jnp.sqrt(bn["var"] + eps)
    return w * inv[:, None], (bn["beta"] - bn["mean"] * inv)[:, None]


def _pick_spatial_tile(hw, per_lane_bytes, budget_bytes, max_ts=4096):
    """Largest multiple-of-128 lane tile that fits `budget_bytes` (hw padded)."""
    if hw <= 128:
        return hw, hw                       # full-extent block is layout-legal
    fit = max(128, (budget_bytes // max(per_lane_bytes, 1)) // 128 * 128)
    ts = min(max_ts, fit, _round_up(hw, 128))
    ts = max(128, ts // 128 * 128)
    hw_pad = _round_up(hw, ts)
    return ts, hw_pad


def convolutional_block_forward(x, params, *, norm=True, is_relu=False,
                                out_dtype=jnp.float32):
    """Fused forward of `convolutional_block` (NCHW input, eval-mode BN)."""
    n, c0, h, w = x.shape
    hw = h * w

    # --- fold conv + BN into per-layer (W, bias) -----------------------------
    w1, b1 = _fold_conv_bn(params["conv1"]["w"], params["conv1"].get("bn"), norm)
    w2, b2 = _fold_conv_bn(params["conv2"]["w"], params["conv2"].get("bn"), norm)
    w3, b3 = _fold_conv_bn(params["conv3"]["w"], params["conv3"].get("bn"), norm)
    ws, bs = _fold_conv_bn(params["shortcut"]["w"],
                           params["shortcut"].get("bn"), norm)
    c1, c2, c3 = w1.shape[0], w2.shape[0], w3.shape[0]

    # Pad conv1 output channels to a multiple of 8 so the stacked [w1; ws]
    # result splits on a sublane-tile boundary; padded rows are all-zero.
    c1p = _round_up(c1, 8)
    if c1p != c1:
        w1 = jnp.pad(w1, ((0, c1p - c1), (0, 0)))
        b1 = jnp.pad(b1, ((0, c1p - c1), (0, 0)))
        w2 = jnp.pad(w2, ((0, 0), (0, c1p - c1)))   # zero K-cols: no-op math
    # Pad conv2 output channels likewise (zero rows -> act(0)=0 -> no-op).
    c2p = _round_up(c2, 8)
    if c2p != c2:
        w2 = jnp.pad(w2, ((0, c2p - c2), (0, 0)))
        b2 = jnp.pad(b2, ((0, c2p - c2), (0, 0)))
        w3 = jnp.pad(w3, ((0, 0), (0, c2p - c2)))

    wa = jnp.concatenate([w1, ws], axis=0)          # (c1p + c3, c0)
    ba = jnp.concatenate([b1, bs], axis=0)          # (c1p + c3, 1)

    # bf16 MXU operands (f32 accumulation happens in-kernel); biases stay f32.
    wdt = jnp.bfloat16
    wa, w2, w3 = wa.astype(wdt), w2.astype(wdt), w3.astype(wdt)

    # --- layout: channels on sublanes, spatial (and maybe batch) on lanes ----
    merge_batch = (c0 < 8) and (n > 1)
    if merge_batch:
        # tiny-c0 path: merge batch into the lane axis (fewer, denser tiles).
        x3 = jnp.transpose(x.reshape(n, c0, hw), (1, 0, 2)).reshape(1, c0, n * hw)
        n_eff, hw_eff = 1, n * hw
    else:
        x3 = x.reshape(n, c0, hw)
        n_eff, hw_eff = n, hw

    out_bytes = jnp.dtype(out_dtype).itemsize

    # Bytes of VMEM per spatial position: double-buffered bf16 x tile +
    # double-buffered out tile + f32 intermediates (ha, h2, h3, residual).
    per_lane = (2 * (c0 * 2 + c3 * out_bytes)
                + (c1p + c2p + 3 * c3) * 4)
    tile_budget = 16 << 20                    # safe on v5e/v6e (128 MiB) & v7x (64 MiB)
    ts, hw_pad = _pick_spatial_tile(hw_eff, per_lane, tile_budget)
    # Keep the parallel grid >= 2 steps (megacore occupancy on multi-TC chips).
    while n_eff * (hw_pad // ts) < 2 and ts >= 256 and ts % 256 == 0:
        ts //= 2

    if hw_pad != hw_eff:
        x3 = jnp.pad(x3, ((0, 0), (0, 0), (0, hw_pad - hw_eff)))
    x3 = x3.astype(jnp.bfloat16)

    grid = (n_eff, hw_pad // ts)

    # --- VMEM budget: pipelined tiles (x2) + resident params (x2 worst case) +
    #     live f32 intermediates, with margin; capped at physical VMEM. -------
    w_elems = (c1p + c3) * c0 + c2p * c1p + c3 * c2p
    b_elems = (c1p + c3) + c2p + c3
    vmem_est = (per_lane * ts                 # pipelined tiles + intermediates
                + w_elems * 2 * 2 + b_elems * 4 * 2   # weights/biases (<=2 bufs)
                + (2 << 20))                  # margin
    try:
        phys_vmem = pltpu.get_tpu_info().vmem_capacity_bytes
    except Exception:
        phys_vmem = 64 << 20                  # conservative (v7x per-TC)
    vmem_bytes = int(min(max(vmem_est, 4 << 20), int(phys_vmem * 3 // 4)))

    flops = 2 * n_eff * hw_pad * ((c1p + c3) * c0 + c2p * c1p + c3 * c2p)
    bytes_accessed = int(x3.size * 2 + n_eff * c3 * hw_pad * out_bytes
                         + w_elems * 2 + b_elems * 4)
    cost = pl.CostEstimate(flops=int(flops), transcendentals=0,
                           bytes_accessed=bytes_accessed)

    kernel = functools.partial(_conv_block_kernel, c1p=c1p, is_relu=is_relu)
    x_spec = pl.BlockSpec((None, c0, ts), lambda i, j: (i, 0, j))
    o_spec = pl.BlockSpec((None, c3, ts), lambda i, j: (i, 0, j))
    const = lambda i, j: (0, 0)

    def _run(single_buffer_weights):
        def wspec(shape):
            if single_buffer_weights:
                # constant index_map -> never re-fetched; one VMEM copy only.
                return pl.BlockSpec(shape, const, pipeline_mode=pl.Buffered(1))
            return pl.BlockSpec(shape, const)

        return pl.pallas_call(
            kernel,
            out_shape=jax.ShapeDtypeStruct((n_eff, c3, hw_pad), out_dtype),
            grid=grid,
            in_specs=[
                x_spec,
                wspec(wa.shape), wspec(ba.shape),
                wspec(w2.shape), wspec(b2.shape),
                wspec(w3.shape), wspec(b3.shape),
            ],
            out_specs=o_spec,
            compiler_params=pltpu.CompilerParams(
                dimension_semantics=("parallel", "parallel"),
                vmem_limit_bytes=vmem_bytes),
            cost_estimate=cost,
        )(x3, wa, ba, w2, b2, w3, b3)

    try:
        out = _run(True)
    except Exception:
        # Fallback for JAX builds that reject Buffered(1) on constant operands.
        out = _run(False)

    out = out[:, :, :hw_eff]
    if merge_batch:
        out = jnp.transpose(out.reshape(c3, n, hw), (1, 0, 2))
    return out.reshape(n, c3, h, w)


# ----------------------------------------------------------------------------
# Pure-numpy reference mirroring the torch module (unfused, for verification)
# ----------------------------------------------------------------------------
def _reference_forward(x, params, *, norm=True, is_relu=False, eps=1e-5):
    def conv1x1(v, wmat):
        return np.einsum("nihw,oi->nohw", v, wmat)

    def bn(v, p):
        g, b, m, var = p["gamma"], p["beta"], p["mean"], p["var"]
        return (g[None, :, None, None] * (v - m[None, :, None, None])
                / np.sqrt(var[None, :, None, None] + eps)
                + b[None, :, None, None])

    def act(v):
        return np.maximum(v, 0.0) if is_relu else np.where(v >= 0.0, v, 0.2 * v)

    def layer(v, p, activation):
        v = conv1x1(v, p["w"])
        if norm:
            v = bn(v, p["bn"])
        return act(v) if activation else v

    h = layer(x, params["conv1"], True)
    h = layer(h, params["conv2"], True)
    h = layer(h, params["conv3"], False)
    s = layer(x, params["shortcut"], False)
    return act(h + s)


if __name__ == "__main__":
    key = jax.random.PRNGKey(0)
    channels = (4, 8, 8, 16)
    N, H, W = 2, 16, 16

    keys = iter(jax.random.split(key, 21))

    def make_layer_params(c_in, c_out):
        wgt = jax.random.normal(next(keys), (c_out, c_in), jnp.float32) / np.sqrt(c_in)
        bn_p = dict(
            gamma=jax.random.uniform(next(keys), (c_out,), jnp.float32, 0.5, 1.5),
            beta=0.1 * jax.random.normal(next(keys), (c_out,), jnp.float32),
            mean=0.1 * jax.random.normal(next(keys), (c_out,), jnp.float32),
            var=jax.random.uniform(next(keys), (c_out,), jnp.float32, 0.5, 1.5),
        )
        return dict(w=wgt, bn=bn_p)

    params = dict(
        conv1=make_layer_params(channels[0], channels[1]),
        conv2=make_layer_params(channels[1], channels[2]),
        conv3=make_layer_params(channels[2], channels[3]),
        shortcut=make_layer_params(channels[0], channels[3]),
    )
    x = jax.random.normal(next(keys), (N, channels[0], H, W), jnp.float32)

    y = convolutional_block_forward(x, params, norm=True, is_relu=False)
    y = jax.block_until_ready(y)

    params_np = jax.tree_util.tree_map(np.asarray, params)
    y_ref = _reference_forward(np.asarray(x), params_np, norm=True, is_relu=False)

    # Tolerance contract: MXU matmuls run with bf16 operands / f32 accumulation
    # (same rounding the previous DEFAULT-precision f32 path incurred); the
    # atol covers accumulated bf16 rounding across three chained matmuls.
    np.testing.assert_allclose(np.asarray(y, np.float32), y_ref,
                               rtol=2e-2, atol=5e-2)
    print("KERNEL_OK")
</pallas_src>

<mosaic_0001>
module attributes {stable_mosaic.version = 11 : i64} {
  func.func @_conv_block_kernel(%arg0: i32, %arg1: i32, %arg2: memref<1x4x256xbf16, #tpu.memory_space<vmem>>, %arg3: memref<24x4xbf16, #tpu.memory_space<vmem>>, %arg4: memref<24x1xf32, #tpu.memory_space<vmem>>, %arg5: memref<8x8xbf16, #tpu.memory_space<vmem>>, %arg6: memref<8x1xf32, #tpu.memory_space<vmem>>, %arg7: memref<16x8xbf16, #tpu.memory_space<vmem>>, %arg8: memref<16x1xf32, #tpu.memory_space<vmem>>, %arg9: memref<1x16x256xf32, #tpu.memory_space<vmem>>) attributes {dimension_semantics = [#tpu.dimension_semantics<parallel>, #tpu.dimension_semantics<parallel>], iteration_bounds = array<i64: 1, 2>, scalar_prefetch = 0 : i64, scratch_operands = 0 : i64, tpu.core_type = #tpu.core_type<tc>, window_params = [{transform_indices = @transform_0, window_bounds = array<i64: 1, 4, 256>}, {pipeline_mode = #tpu.pipeline_mode<synchronous>, transform_indices = @transform_1, window_bounds = array<i64: 24, 4>}, {pipeline_mode = #tpu.pipeline_mode<synchronous>, transform_indices = @transform_2, window_bounds = array<i64: 24, 1>}, {pipeline_mode = #tpu.pipeline_mode<synchronous>, transform_indices = @transform_3, window_bounds = array<i64: 8, 8>}, {pipeline_mode = #tpu.pipeline_mode<synchronous>, transform_indices = @transform_4, window_bounds = array<i64: 8, 1>}, {pipeline_mode = #tpu.pipeline_mode<synchronous>, transform_indices = @transform_5, window_bounds = array<i64: 16, 8>}, {pipeline_mode = #tpu.pipeline_mode<synchronous>, transform_indices = @transform_6, window_bounds = array<i64: 16, 1>}, {transform_indices = @transform_7, window_bounds = array<i64: 1, 16, 256>}]} {
    %c0 = arith.constant 0 : index
    %c0_0 = arith.constant 0 : index
    %c0_1 = arith.constant 0 : index
    %0 = vector.load %arg2[%c0, %c0_0, %c0_1] : memref<1x4x256xbf16, #tpu.memory_space<vmem>>, vector<1x4x256xbf16>
    %1 = vector.shape_cast %0 : vector<1x4x256xbf16> to vector<4x256xbf16>
    %c0_2 = arith.constant 0 : index
    %c0_3 = arith.constant 0 : index
    %2 = vector.load %arg3[%c0_2, %c0_3] : memref<24x4xbf16, #tpu.memory_space<vmem>>, vector<24x4xbf16>
    %cst = arith.constant dense<0.000000e+00> : vector<24x256xf32>
    %3 = tpu.matmul %2, %1, %cst {dimension_numbers = #tpu.dot_dimension_numbers<[1], [0], [0], [1], [0, 0, 1, 1], [], []>} : vector<24x4xbf16>, vector<4x256xbf16>, vector<24x256xf32> -> vector<24x256xf32>
    %c0_4 = arith.constant 0 : index
    %c0_5 = arith.constant 0 : index
    %4 = vector.load %arg4[%c0_4, %c0_5] : memref<24x1xf32, #tpu.memory_space<vmem>>, vector<24x1xf32>
    %5 = vector.broadcast %4 : vector<24x1xf32> to vector<24x256xf32>
    %6 = arith.addf %3, %5 : vector<24x256xf32>
    %7 = vector.extract_strided_slice %6 {offsets = [0, 0], sizes = [8, 256], strides = [1, 1]} : vector<24x256xf32> to vector<8x256xf32>
    %cst_6 = arith.constant 0.000000e+00 : f32
    %8 = vector.broadcast %cst_6 : f32 to vector<8x256xf32>
    %9 = arith.cmpf oge, %7, %8 : vector<8x256xf32>
    %cst_7 = arith.constant 2.000000e-01 : f32
    %10 = vector.broadcast %cst_7 : f32 to vector<8x256xf32>
    %11 = arith.mulf %10, %7 : vector<8x256xf32>
    %12 = arith.select %9, %7, %11 : vector<8x256xi1>, vector<8x256xf32>
    %13 = vector.extract_strided_slice %6 {offsets = [8, 0], sizes = [16, 256], strides = [1, 1]} : vector<24x256xf32> to vector<16x256xf32>
    %c0_8 = arith.constant 0 : index
    %c0_9 = arith.constant 0 : index
    %14 = vector.load %arg5[%c0_8, %c0_9] : memref<8x8xbf16, #tpu.memory_space<vmem>>, vector<8x8xbf16>
    %15 = arith.truncf %12 : vector<8x256xf32> to vector<8x256xbf16>
    %cst_10 = arith.constant dense<0.000000e+00> : vector<8x256xf32>
    %16 = tpu.matmul %14, %15, %cst_10 {dimension_numbers = #tpu.dot_dimension_numbers<[1], [0], [0], [1], [0, 0, 1, 1], [], []>} : vector<8x8xbf16>, vector<8x256xbf16>, vector<8x256xf32> -> vector<8x256xf32>
    %c0_11 = arith.constant 0 : index
    %c0_12 = arith.constant 0 : index
    %17 = vector.load %arg6[%c0_11, %c0_12] : memref<8x1xf32, #tpu.memory_space<vmem>>, vector<8x1xf32>
    %18 = vector.broadcast %17 : vector<8x1xf32> to vector<8x256xf32>
    %19 = arith.addf %16, %18 : vector<8x256xf32>
    %cst_13 = arith.constant 0.000000e+00 : f32
    %20 = vector.broadcast %cst_13 : f32 to vector<8x256xf32>
    %21 = arith.cmpf oge, %19, %20 : vector<8x256xf32>
    %cst_14 = arith.constant 2.000000e-01 : f32
    %22 = vector.broadcast %cst_14 : f32 to vector<8x256xf32>
    %23 = arith.mulf %22, %19 : vector<8x256xf32>
    %24 = arith.select %21, %19, %23 : vector<8x256xi1>, vector<8x256xf32>
    %c0_15 = arith.constant 0 : index
    %c0_16 = arith.constant 0 : index
    %25 = vector.load %arg7[%c0_15, %c0_16] : memref<16x8xbf16, #tpu.memory_space<vmem>>, vector<16x8xbf16>
    %26 = arith.truncf %24 : vector<8x256xf32> to vector<8x256xbf16>
    %cst_17 = arith.constant dense<0.000000e+00> : vector<16x256xf32>
    %27 = tpu.matmul %25, %26, %cst_17 {dimension_numbers = #tpu.dot_dimension_numbers<[1], [0], [0], [1], [0, 0, 1, 1], [], []>} : vector<16x8xbf16>, vector<8x256xbf16>, vector<16x256xf32> -> vector<16x256xf32>
    %c0_18 = arith.constant 0 : index
    %c0_19 = arith.constant 0 : index
    %28 = vector.load %arg8[%c0_18, %c0_19] : memref<16x1xf32, #tpu.memory_space<vmem>>, vector<16x1xf32>
    %29 = vector.broadcast %28 : vector<16x1xf32> to vector<16x256xf32>
    %30 = arith.addf %27, %29 : vector<16x256xf32>
    %31 = arith.addf %30, %13 : vector<16x256xf32>
    %cst_20 = arith.constant 0.000000e+00 : f32
    %32 = vector.broadcast %cst_20 : f32 to vector<16x256xf32>
    %33 = arith.cmpf oge, %31, %32 : vector<16x256xf32>
    %cst_21 = arith.constant 2.000000e-01 : f32
    %34 = vector.broadcast %cst_21 : f32 to vector<16x256xf32>
    %35 = arith.mulf %34, %31 : vector<16x256xf32>
    %36 = arith.select %33, %31, %35 : vector<16x256xi1>, vector<16x256xf32>
    %c0_22 = arith.constant 0 : index
    %c0_23 = arith.constant 0 : index
    %c0_24 = arith.constant 0 : index
    %37 = vector.load %arg9[%c0_22, %c0_23, %c0_24] : memref<1x16x256xf32, #tpu.memory_space<vmem>>, vector<1x16x256xf32>
    %38 = vector.shape_cast %37 : vector<1x16x256xf32> to vector<16x256xf32>
    %39 = vector.shape_cast %36 : vector<16x256xf32> to vector<1x16x256xf32>
    tpu.vector_store %arg9[%c0_22, %c0_23, %c0_24], %39 {strides = array<i32>} : memref<1x16x256xf32, #tpu.memory_space<vmem>>, vector<1x16x256xf32>,
    return
  }
  func.func @transform_0(%arg0: i32, %arg1: i32) -> (i32, i32, i32) {
    %c0_i32 = arith.constant 0 : i32
    %c0_i32_0 = arith.constant 0 : i32
    return %arg0, %c0_i32, %arg1 : i32, i32, i32
  }
  func.func @transform_1(%arg0: i32, %arg1: i32) -> (i32, i32) {
    %c0_i32 = arith.constant 0 : i32
    %c0_i32_0 = arith.constant 0 : i32
    %c0_i32_1 = arith.constant 0 : i32
    return %c0_i32, %c0_i32_0 : i32, i32
  }
  func.func @transform_2(%arg0: i32, %arg1: i32) -> (i32, i32) {
    %c0_i32 = arith.constant 0 : i32
    %c0_i32_0 = arith.constant 0 : i32
    %c0_i32_1 = arith.constant 0 : i32
    return %c0_i32, %c0_i32_0 : i32, i32
  }
  func.func @transform_3(%arg0: i32, %arg1: i32) -> (i32, i32) {
    %c0_i32 = arith.constant 0 : i32
    %c0_i32_0 = arith.constant 0 : i32
    %c0_i32_1 = arith.constant 0 : i32
    return %c0_i32, %c0_i32_0 : i32, i32
  }
  func.func @transform_4(%arg0: i32, %arg1: i32) -> (i32, i32) {
    %c0_i32 = arith.constant 0 : i32
    %c0_i32_0 = arith.constant 0 : i32
    %c0_i32_1 = arith.constant 0 : i32
    return %c0_i32, %c0_i32_0 : i32, i32
  }
  func.func @transform_5(%arg0: i32, %arg1: i32) -> (i32, i32) {
    %c0_i32 = arith.constant 0 : i32
    %c0_i32_0 = arith.constant 0 : i32
    %c0_i32_1 = arith.constant 0 : i32
    return %c0_i32, %c0_i32_0 : i32, i32
  }
  func.func @transform_6(%arg0: i32, %arg1: i32) -> (i32, i32) {
    %c0_i32 = arith.constant 0 : i32
    %c0_i32_0 = arith.constant 0 : i32
    %c0_i32_1 = arith.constant 0 : i32
    return %c0_i32, %c0_i32_0 : i32, i32
  }
  func.func @transform_7(%arg0: i32, %arg1: i32) -> (i32, i32, i32) {
    %c0_i32 = arith.constant 0 : i32
    %c0_i32_0 = arith.constant 0 : i32
    return %arg0, %c0_i32, %arg1 : i32, i32, i32
  }
}

module attributes {stable_mosaic.version = 11 : i64} {
  func.func @_conv_block_kernel(%arg0: i32, %arg1: i32, %arg2: memref<1x4x256xbf16, #tpu.memory_space<vmem>>, %arg3: memref<24x4xbf16, #tpu.memory_space<vmem>>, %arg4: memref<24x1xf32, #tpu.memory_space<vmem>>, %arg5: memref<8x8xbf16, #tpu.memory_space<vmem>>, %arg6: memref<8x1xf32, #tpu.memory_space<vmem>>, %arg7: memref<16x8xbf16, #tpu.memory_space<vmem>>, %arg8: memref<16x1xf32, #tpu.memory_space<vmem>>, %arg9: memref<1x16x256xf32, #tpu.memory_space<vmem>>) attributes {dimension_semantics = [#tpu.dimension_semantics<parallel>, #tpu.dimension_semantics<parallel>], iteration_bounds = array<i64: 1, 2>, scalar_prefetch = 0 : i64, scratch_operands = 0 : i64, tpu.core_type = #tpu.core_type<tc>, window_params = [{transform_indices = @transform_0, window_bounds = array<i64: 1, 4, 256>}, {pipeline_mode = #tpu.pipeline_mode<synchronous>, transform_indices = @transform_1, window_bounds = array<i64: 24, 4>}, {pipeline_mode = #tpu.pipeline_mode<synchronous>, transform_indices = @transform_2, window_bounds = array<i64: 24, 1>}, {pipeline_mode = #tpu.pipeline_mode<synchronous>, transform_indices = @transform_3, window_bounds = array<i64: 8, 8>}, {pipeline_mode = #tpu.pipeline_mode<synchronous>, transform_indices = @transform_4, window_bounds = array<i64: 8, 1>}, {pipeline_mode = #tpu.pipeline_mode<synchronous>, transform_indices = @transform_5, window_bounds = array<i64: 16, 8>}, {pipeline_mode = #tpu.pipeline_mode<synchronous>, transform_indices = @transform_6, window_bounds = array<i64: 16, 1>}, {transform_indices = @transform_7, window_bounds = array<i64: 1, 16, 256>}]} {
    %c0 = arith.constant 0 : index
    %c0_0 = arith.constant 0 : index
    %c0_1 = arith.constant 0 : index
    %0 = vector.load %arg2[%c0, %c0_0, %c0_1] : memref<1x4x256xbf16, #tpu.memory_space<vmem>>, vector<1x4x256xbf16>
    %1 = vector.shape_cast %0 : vector<1x4x256xbf16> to vector<4x256xbf16>
    %c0_2 = arith.constant 0 : index
    %c0_3 = arith.constant 0 : index
    %2 = vector.load %arg3[%c0_2, %c0_3] : memref<24x4xbf16, #tpu.memory_space<vmem>>, vector<24x4xbf16>
    %cst = arith.constant dense<0.000000e+00> : vector<24x256xf32>
    %3 = tpu.matmul %2, %1, %cst {dimension_numbers = #tpu.dot_dimension_numbers<[1], [0], [0], [1], [0, 0, 1, 1], [], []>} : vector<24x4xbf16>, vector<4x256xbf16>, vector<24x256xf32> -> vector<24x256xf32>
    %c0_4 = arith.constant 0 : index
    %c0_5 = arith.constant 0 : index
    %4 = vector.load %arg4[%c0_4, %c0_5] : memref<24x1xf32, #tpu.memory_space<vmem>>, vector<24x1xf32>
    %5 = vector.broadcast %4 : vector<24x1xf32> to vector<24x256xf32>
    %6 = arith.addf %3, %5 : vector<24x256xf32>
    %7 = vector.extract_strided_slice %6 {offsets = [0, 0], sizes = [8, 256], strides = [1, 1]} : vector<24x256xf32> to vector<8x256xf32>
    %cst_6 = arith.constant 0.000000e+00 : f32
    %8 = vector.broadcast %cst_6 : f32 to vector<8x256xf32>
    %9 = arith.cmpf oge, %7, %8 : vector<8x256xf32>
    %cst_7 = arith.constant 2.000000e-01 : f32
    %10 = vector.broadcast %cst_7 : f32 to vector<8x256xf32>
    %11 = arith.mulf %10, %7 : vector<8x256xf32>
    %12 = arith.select %9, %7, %11 : vector<8x256xi1>, vector<8x256xf32>
    %13 = vector.extract_strided_slice %6 {offsets = [8, 0], sizes = [16, 256], strides = [1, 1]} : vector<24x256xf32> to vector<16x256xf32>
    %c0_8 = arith.constant 0 : index
    %c0_9 = arith.constant 0 : index
    %14 = vector.load %arg5[%c0_8, %c0_9] : memref<8x8xbf16, #tpu.memory_space<vmem>>, vector<8x8xbf16>
    %15 = arith.truncf %12 : vector<8x256xf32> to vector<8x256xbf16>
    %cst_10 = arith.constant dense<0.000000e+00> : vector<8x256xf32>
    %16 = tpu.matmul %14, %15, %cst_10 {dimension_numbers = #tpu.dot_dimension_numbers<[1], [0], [0], [1], [0, 0, 1, 1], [], []>} : vector<8x8xbf16>, vector<8x256xbf16>, vector<8x256xf32> -> vector<8x256xf32>
    %c0_11 = arith.constant 0 : index
    %c0_12 = arith.constant 0 : index
    %17 = vector.load %arg6[%c0_11, %c0_12] : memref<8x1xf32, #tpu.memory_space<vmem>>, vector<8x1xf32>
    %18 = vector.broadcast %17 : vector<8x1xf32> to vector<8x256xf32>
    %19 = arith.addf %16, %18 : vector<8x256xf32>
    %cst_13 = arith.constant 0.000000e+00 : f32
    %20 = vector.broadcast %cst_13 : f32 to vector<8x256xf32>
    %21 = arith.cmpf oge, %19, %20 : vector<8x256xf32>
    %cst_14 = arith.constant 2.000000e-01 : f32
    %22 = vector.broadcast %cst_14 : f32 to vector<8x256xf32>
    %23 = arith.mulf %22, %19 : vector<8x256xf32>
    %24 = arith.select %21, %19, %23 : vector<8x256xi1>, vector<8x256xf32>
    %c0_15 = arith.constant 0 : index
    %c0_16 = arith.constant 0 : index
    %25 = vector.load %arg7[%c0_15, %c0_16] : memref<16x8xbf16, #tpu.memory_space<vmem>>, vector<16x8xbf16>
    %26 = arith.truncf %24 : vector<8x256xf32> to vector<8x256xbf16>
    %cst_17 = arith.constant dense<0.000000e+00> : vector<16x256xf32>
    %27 = tpu.matmul %25, %26, %cst_17 {dimension_numbers = #tpu.dot_dimension_numbers<[1], [0], [0], [1], [0, 0, 1, 1], [], []>} : vector<16x8xbf16>, vector<8x256xbf16>, vector<16x256xf32> -> vector<16x256xf32>
    %c0_18 = arith.constant 0 : index
    %c0_19 = arith.constant 0 : index
    %28 = vector.load %arg8[%c0_18, %c0_19] : memref<16x1xf32, #tpu.memory_space<vmem>>, vector<16x1xf32>
    %29 = vector.broadcast %28 : vector<16x1xf32> to vector<16x256xf32>
    %30 = arith.addf %27, %29 : vector<16x256xf32>
    %31 = arith.addf %30, %13 : vector<16x256xf32>
    %cst_20 = arith.constant 0.000000e+00 : f32
    %32 = vector.broadcast %cst_20 : f32 to vector<16x256xf32>
    %33 = arith.cmpf oge, %31, %32 : vector<16x256xf32>
    %cst_21 = arith.constant 2.000000e-01 : f32
    %34 = vector.broadcast %cst_21 : f32 to vector<16x256xf32>
    %35 = arith.mulf %34, %31 : vector<16x256xf32>
    %36 = arith.select %33, %31, %35 : vector<16x256xi1>, vector<16x256xf32>
    %c0_22 = arith.constant 0 : index
    %c0_23 = arith.constant 0 : index
    %c0_24 = arith.constant 0 : index
    %37 = vector.load %arg9[%c0_22, %c0_23, %c0_24] : memref<1x16x256xf32, #tpu.memory_space<vmem>>, vector<1x16x256xf32>
    %38 = vector.shape_cast %37 : vector<1x16x256xf32> to vector<16x256xf32>
    %39 = vector.shape_cast %36 : vector<16x256xf32> to vector<1x16x256xf32>
    tpu.vector_store %arg9[%c0_22, %c0_23, %c0_24], %39 {strides = array<i32>} : memref<1x16x256xf32, #tpu.memory_space<vmem>>, vector<1x16x256xf32>,
    return
  }
  func.func @transform_0(%arg0: i32, %arg1: i32) -> (i32, i32, i32) {
    %c0_i32 = arith.constant 0 : i32
    %c0_i32_0 = arith.constant 0 : i32
    return %arg0, %c0_i32, %arg1 : i32, i32, i32
  }
  func.func @transform_1(%arg0: i32, %arg1: i32) -> (i32, i32) {
    %c0_i32 = arith.constant 0 : i32
    %c0_i32_0 = arith.constant 0 : i32
    %c0_i32_1 = arith.constant 0 : i32
    return %c0_i32, %c0_i32_0 : i32, i32
  }
  func.func @transform_2(%arg0: i32, %arg1: i32) -> (i32, i32) {
    %c0_i32 = arith.constant 0 : i32
    %c0_i32_0 = arith.constant 0 : i32
    %c0_i32_1 = arith.constant 0 : i32
    return %c0_i32, %c0_i32_0 : i32, i32
  }
  func.func @transform_3(%arg0: i32, %arg1: i32) -> (i32, i32) {
    %c0_i32 = arith.constant 0 : i32
    %c0_i32_0 = arith.constant 0 : i32
    %c0_i32_1 = arith.constant 0 : i32
    return %c0_i32, %c0_i32_0 : i32, i32
  }
  func.func @transform_4(%arg0: i32, %arg1: i32) -> (i32, i32) {
    %c0_i32 = arith.constant 0 : i32
    %c0_i32_0 = arith.constant 0 : i32
    %c0_i32_1 = arith.constant 0 : i32
    return %c0_i32, %c0_i32_0 : i32, i32
  }
  func.func @transform_5(%arg0: i32, %arg1: i32) -> (i32, i32) {
    %c0_i32 = arith.constant 0 : i32
    %c0_i32_0 = arith.constant 0 : i32
    %c0_i32_1 = arith.constant 0 : i32
    return %c0_i32, %c0_i32_0 : i32, i32
  }
  func.func @transform_6(%arg0: i32, %arg1: i32) -> (i32, i32) {
    %c0_i32 = arith.constant 0 : i32
    %c0_i32_0 = arith.constant 0 : i32
    %c0_i32_1 = arith.constant 0 : i32
    return %c0_i32, %c0_i32_0 : i32, i32
  }
  func.func @transform_7(%arg0: i32, %arg1: i32) -> (i32, i32, i32) {
    %c0_i32 = arith.constant 0 : i32
    %c0_i32_0 = arith.constant 0 : i32
    return %arg0, %c0_i32, %arg1 : i32, i32, i32
  }
}

</mosaic_0001>

<llo_original>
// kernel: tpu_custom_call.1
$region0: #{tpu_custom_call.1}
  #allocation0 [shape = 'u32[]', space=smem, size = 0x4, offset = 0x4, fixed_abs, tag = 'smem constant byte address 0x4 - core index']
  #allocation1 [shape = 'u32[144,128]{1,0:T(1,128)}', space=vmem, size = 0x12000, scoped, tag = 'internal scratch']
  %s0 = inlined_call_operand.vmem [shape: bf16[1,4,512], index: 0, kind: input, shape index: {}]
  %s1 = inlined_call_operand.vmem [shape: bf16[24,4], index: 1, kind: input, shape index: {}]
  %s2 = inlined_call_operand.vmem [shape: f32[24,1], index: 2, kind: input, shape index: {}]
  %s3 = inlined_call_operand.vmem [shape: bf16[8,8], index: 3, kind: input, shape index: {}]
  %s4 = inlined_call_operand.vmem [shape: f32[8,1], index: 4, kind: input, shape index: {}]
  %s5 = inlined_call_operand.vmem [shape: bf16[16,8], index: 5, kind: input, shape index: {}]
  %s6 = inlined_call_operand.vmem [shape: f32[16,1], index: 6, kind: input, shape index: {}]
  %s7 = inlined_call_operand.hbm [shape: f32[1,16,512], index: 7, kind: output, shape index: {}]
  %s8 = sld [smem:[#allocation0]]
  $region61: #{tpu_custom_call.1} parent=0
    _
  %s10 = ssub.s32 1, %s8
  %s11 = scalar_select 0, %s10, %s8
  $region1: #{tpu_custom_call.1} parent=0
    #allocation2 [shape = 'u8[32768]{0}', space=vmem, size = 0x8000, scoped, tag = 'output window, operand 0']
    #allocation3 [shape = 's32[2]{0}', space=sflag, size = 0x8, scoped, tag = 'scoped memory for tpu_custom_call.1']
    %12 = vsyncpa [#allocation3], 0
    %s13 = scalar_lea.sflag [#allocation3], 1
    %14 = vsyncpa %s13, 0
    loop: start=0, step=1, limit=4
    $region2: #{tpu_custom_call.1} parent=1 // loop_pre_header
      _
    $region3: #{tpu_custom_call.1} parent=1 // loop_header
      %s16 = sphi 0, %s20
      %p17 = scmp.ge.s32.totalorder %s16, 4
      %s23 = sphi 0, %s35
      %s24 = sphi 0, %s31
      %s25 = sphi 0, %s23
      %s26 = sphi 0, %s24
      %s27 = sphi 0, %s25
      %s28 = sphi 0, %s26
      %s40 = sphi 0, %s42
      %s43 = sphi 0, %s40
      %s44 = sphi 0, %s43
      %s60 = sphi 0, %s44
      %s64 = sphi 0, %s64
      %s66 = sphi 0, %s64
      %s67 = sphi 0, %s66
      %s81 = sphi 0, %s67
      %s85 = sphi 0, %s85
      %s87 = sphi 0, %s85
      %s88 = sphi 0, %s87
      %s102 = sphi 0, %s88
      %s106 = sphi 0, %s106
      %s108 = sphi 0, %s106
      %s109 = sphi 0, %s108
      %s123 = sphi 0, %s109
      %s127 = sphi 0, %s127
      %s129 = sphi 0, %s127
      %s130 = sphi 0, %s129
      %s144 = sphi 0, %s130
      %s148 = sphi 0, %s148
      %s150 = sphi 0, %s148
      %s151 = sphi 0, %s150
      %s165 = sphi 0, %s151
      %s169 = sphi 0, %s169
      %s171 = sphi 0, %s169
      %s172 = sphi 0, %s171
      %s186 = sphi 0, %s172
      %s194 = sphi 0, %s196
      %s197 = sphi 0, %s194
      %s198 = sphi 0, %s197
      %s214 = sphi 0, %s198
    $region4: #{tpu_custom_call.1} parent=1 // loop_header_branch
      %19 = sbr.rel (%p17) target = $region8
    $region5: #{tpu_custom_call.1} parent=1 // loop_body
      %s21 = ssub.s32 %s16, 1
      %s22 = ssub.s32 %s16, 2
      %s29 = sadd.s32 1, %s24
      %p30 = scmp.ge.s32.totalorder %s29, 2
      %s31 = scalar_select %p30, 0, %s29
      %s32 = sadd.s32 1, %s23
      %s33 = scalar_select %p30, %s32, %s23
      %p34 = scmp.ge.s32.totalorder %s33, 1
      %s35 = scalar_select %p34, 0, %s33
      %s36 = ssub.s32 %s23, %s35
      %s37 = ssub.s32 %s24, %s31
      %s38 = sor.u32 %s36, %s37
      %p39 = scmp.eq.s32.totalorder %s38, 0
      %s41 = sadd.s32 %s40, 1
      %s42 = scalar_select %p39, %s40, %s41
      %p45 = pneg %p39
      %p46 = scmp.eq.s32.totalorder %s16, 1
      %p47 = por %p45, %p46
      %p48 = scmp.ne.s32.totalorder %s40, %s43
      %p49 = scmp.eq.s32.totalorder %s16, 0
      %p50 = por %p48, %p49
      %p51 = scmp.ne.s32.totalorder %s40, %s43
      %p52 = scmp.eq.s32.totalorder %s21, 1
      %p53 = por %p51, %p52
      %p54 = scmp.ne.s32.totalorder %s43, %s44
      %p55 = scmp.eq.s32.totalorder %s21, 0
      %p56 = por %p54, %p55
      %p57 = scmp.ne.s32.totalorder %s43, %s44
      %p58 = scmp.eq.s32.totalorder %s22, 1
      %p59 = por %p57, %p58
      %p61 = scmp.ne.s32.totalorder %s44, %s60
      %p62 = scmp.eq.s32.totalorder %s22, 0
      %p63 = por %p61, %p62
      %s65 = sadd.s32 %s64, 1
      %p68 = scmp.eq.s32.totalorder %s16, 1
      %p69 = scmp.ne.s32.totalorder %s64, %s66
      %p70 = scmp.eq.s32.totalorder %s16, 0
      %p71 = por %p69, %p70
      %p72 = scmp.ne.s32.totalorder %s64, %s66
      %p73 = scmp.eq.s32.totalorder %s21, 1
      %p74 = por %p72, %p73
      %p75 = scmp.ne.s32.totalorder %s66, %s67
      %p76 = scmp.eq.s32.totalorder %s21, 0
      %p77 = por %p75, %p76
      %p78 = scmp.ne.s32.totalorder %s66, %s67
      %p79 = scmp.eq.s32.totalorder %s22, 1
      %p80 = por %p78, %p79
      %p82 = scmp.ne.s32.totalorder %s67, %s81
      %p83 = scmp.eq.s32.totalorder %s22, 0
      %p84 = por %p82, %p83
      %s86 = sadd.s32 %s85, 1
      %p89 = scmp.eq.s32.totalorder %s16, 1
      %p90 = scmp.ne.s32.totalorder %s85, %s87
      %p91 = scmp.eq.s32.totalorder %s16, 0
      %p92 = por %p90, %p91
      %p93 = scmp.ne.s32.totalorder %s85, %s87
      %p94 = scmp.eq.s32.totalorder %s21, 1
      %p95 = por %p93, %p94
      %p96 = scmp.ne.s32.totalorder %s87, %s88
      %p97 = scmp.eq.s32.totalorder %s21, 0
      %p98 = por %p96, %p97
      %p99 = scmp.ne.s32.totalorder %s87, %s88
      %p100 = scmp.eq.s32.totalorder %s22, 1
      %p101 = por %p99, %p100
      %p103 = scmp.ne.s32.totalorder %s88, %s102
      %p104 = scmp.eq.s32.totalorder %s22, 0
      %p105 = por %p103, %p104
      %s107 = sadd.s32 %s106, 1
      %p110 = scmp.eq.s32.totalorder %s16, 1
      %p111 = scmp.ne.s32.totalorder %s106, %s108
      %p112 = scmp.eq.s32.totalorder %s16, 0
      %p113 = por %p111, %p112
      %p114 = scmp.ne.s32.totalorder %s106, %s108
      %p115 = scmp.eq.s32.totalorder %s21, 1
      %p116 = por %p114, %p115
      %p117 = scmp.ne.s32.totalorder %s108, %s109
      %p118 = scmp.eq.s32.totalorder %s21, 0
      %p119 = por %p117, %p118
      %p120 = scmp.ne.s32.totalorder %s108, %s109
      %p121 = scmp.eq.s32.totalorder %s22, 1
      %p122 = por %p120, %p121
      %p124 = scmp.ne.s32.totalorder %s109, %s123
      %p125 = scmp.eq.s32.totalorder %s22, 0
      %p126 = por %p124, %p125
      %s128 = sadd.s32 %s127, 1
      %p131 = scmp.eq.s32.totalorder %s16, 1
      %p132 = scmp.ne.s32.totalorder %s127, %s129
      %p133 = scmp.eq.s32.totalorder %s16, 0
      %p134 = por %p132, %p133
      %p135 = scmp.ne.s32.totalorder %s127, %s129
      %p136 = scmp.eq.s32.totalorder %s21, 1
      %p137 = por %p135, %p136
      %p138 = scmp.ne.s32.totalorder %s129, %s130
      %p139 = scmp.eq.s32.totalorder %s21, 0
      %p140 = por %p138, %p139
      %p141 = scmp.ne.s32.totalorder %s129, %s130
      %p142 = scmp.eq.s32.totalorder %s22, 1
      %p143 = por %p141, %p142
      %p145 = scmp.ne.s32.totalorder %s130, %s144
      %p146 = scmp.eq.s32.totalorder %s22, 0
      %p147 = por %p145, %p146
      %s149 = sadd.s32 %s148, 1
      %p152 = scmp.eq.s32.totalorder %s16, 1
      %p153 = scmp.ne.s32.totalorder %s148, %s150
      %p154 = scmp.eq.s32.totalorder %s16, 0
      %p155 = por %p153, %p154
      %p156 = scmp.ne.s32.totalorder %s148, %s150
      %p157 = scmp.eq.s32.totalorder %s21, 1
      %p158 = por %p156, %p157
      %p159 = scmp.ne.s32.totalorder %s150, %s151
      %p160 = scmp.eq.s32.totalorder %s21, 0
      %p161 = por %p159, %p160
      %p162 = scmp.ne.s32.totalorder %s150, %s151
      %p163 = scmp.eq.s32.totalorder %s22, 1
      %p164 = por %p162, %p163
      %p166 = scmp.ne.s32.totalorder %s151, %s165
      %p167 = scmp.eq.s32.totalorder %s22, 0
      %p168 = por %p166, %p167
      %s170 = sadd.s32 %s169, 1
      %p173 = scmp.eq.s32.totalorder %s16, 1
      %p174 = scmp.ne.s32.totalorder %s169, %s171
      %p175 = scmp.eq.s32.totalorder %s16, 0
      %p176 = por %p174, %p175
      %p177 = scmp.ne.s32.totalorder %s169, %s171
      %p178 = scmp.eq.s32.totalorder %s21, 1
      %p179 = por %p177, %p178
      %p180 = scmp.ne.s32.totalorder %s171, %s172
      %p181 = scmp.eq.s32.totalorder %s21, 0
      %p182 = por %p180, %p181
      %p183 = scmp.ne.s32.totalorder %s171, %s172
      %p184 = scmp.eq.s32.totalorder %s22, 1
      %p185 = por %p183, %p184
      %p187 = scmp.ne.s32.totalorder %s172, %s186
      %p188 = scmp.eq.s32.totalorder %s22, 0
      %p189 = por %p187, %p188
      %s190 = ssub.s32 %s23, %s35
      %s191 = ssub.s32 %s24, %s31
      %s192 = sor.u32 %s190, %s191
      %p193 = scmp.eq.s32.totalorder %s192, 0
      %s195 = sadd.s32 %s194, 1
      %s196 = scalar_select %p193, %s194, %s195
      %p199 = pneg %p193
      %p200 = scmp.eq.s32.totalorder %s16, 1
      %p201 = por %p199, %p200
      %p202 = scmp.ne.s32.totalorder %s194, %s197
      %p203 = scmp.eq.s32.totalorder %s16, 0
      %p204 = por %p202, %p203
      %p205 = scmp.ne.s32.totalorder %s194, %s197
      %p206 = scmp.eq.s32.totalorder %s21, 1
      %p207 = por %p205, %p206
      %p208 = scmp.ne.s32.totalorder %s197, %s198
      %p209 = scmp.eq.s32.totalorder %s21, 0
      %p210 = por %p208, %p209
      %p211 = scmp.ne.s32.totalorder %s197, %s198
      %p212 = scmp.eq.s32.totalorder %s22, 1
      %p213 = por %p211, %p212
      %p215 = scmp.ne.s32.totalorder %s198, %s214
      %p216 = scmp.eq.s32.totalorder %s22, 0
      %p217 = por %p215, %p216
      %p218 = scmp.le.s32.totalorder 1, %s16
      %p219 = scmp.lt.s32.totalorder %s16, 3
      %p220 = pnand %p218, %p219
      %p221 = pneg %p220
      // Predicated region
      $region9: #{tpu_custom_call.1} parent=5 // pred_check
        _
      $region10: #{tpu_custom_call.1} parent=5 // pred_check_branch
        %223 = sbr.rel (%p220) target = $region12
      $region11: #{tpu_custom_call.1} parent=5 // pred_region
        %s224 = ssub.s32 %s16, 1
        // Predicated region
        $region13: #{tpu_custom_call.1} parent=11 // pred_check
          %p225 = pneg %p77
        $region14: #{tpu_custom_call.1} parent=11 // pred_check_branch
          %227 = sbr.rel (%p225) target = $region16
        $region15: #{tpu_custom_call.1} parent=11 // pred_region
          _
        $region16: #{tpu_custom_call.1} parent=11 // pred_fallthru
          _
        // Predicated region
        $region17: #{tpu_custom_call.1} parent=11 // pred_check
          %p228 = pneg %p98
        $region18: #{tpu_custom_call.1} parent=11 // pred_check_branch
          %230 = sbr.rel (%p228) target = $region20
        $region19: #{tpu_custom_call.1} parent=11 // pred_region
          _
        $region20: #{tpu_custom_call.1} parent=11 // pred_fallthru
          _
        // Predicated region
        $region21: #{tpu_custom_call.1} parent=11 // pred_check
          %p231 = pneg %p119
        $region22: #{tpu_custom_call.1} parent=11 // pred_check_branch
          %233 = sbr.rel (%p231) target = $region24
        $region23: #{tpu_custom_call.1} parent=11 // pred_region
          _
        $region24: #{tpu_custom_call.1} parent=11 // pred_fallthru
          _
        // Predicated region
        $region25: #{tpu_custom_call.1} parent=11 // pred_check
          %p234 = pneg %p140
        $region26: #{tpu_custom_call.1} parent=11 // pred_check_branch
          %236 = sbr.rel (%p234) target = $region28
        $region27: #{tpu_custom_call.1} parent=11 // pred_region
          _
        $region28: #{tpu_custom_call.1} parent=11 // pred_fallthru
          _
        // Predicated region
        $region29: #{tpu_custom_call.1} parent=11 // pred_check
          %p237 = pneg %p161
        $region30: #{tpu_custom_call.1} parent=11 // pred_check_branch
          %239 = sbr.rel (%p237) target = $region32
        $region31: #{tpu_custom_call.1} parent=11 // pred_region
          _
        $region32: #{tpu_custom_call.1} parent=11 // pred_fallthru
          _
        // Predicated region
        $region33: #{tpu_custom_call.1} parent=11 // pred_check
          %p240 = pneg %p182
        $region34: #{tpu_custom_call.1} parent=11 // pred_check_branch
          %242 = sbr.rel (%p240) target = $region36
        $region35: #{tpu_custom_call.1} parent=11 // pred_region
          _
        $region36: #{tpu_custom_call.1} parent=11 // pred_fallthru
          _
      $region12: #{tpu_custom_call.1} parent=5 // pred_fallthru
        _
      %p243 = scmp.lt.s32.totalorder %s16, 2
      // Predicated region
      $region37: #{tpu_custom_call.1} parent=5 // pred_check
        %p244 = pneg %p243
      $region38: #{tpu_custom_call.1} parent=5 // pred_check_branch
        %246 = sbr.rel (%p244) target = $region40
      $region39: #{tpu_custom_call.1} parent=5 // pred_region
        // Predicated region
        $region41: #{tpu_custom_call.1} parent=39 // pred_check
          %p247 = pneg %p50
        $region42: #{tpu_custom_call.1} parent=39 // pred_check_branch
          %249 = sbr.rel (%p247) target = $region44
        $region43: #{tpu_custom_call.1} parent=39 // pred_region
          %s250 = smul.u32 2, %s24
          %p251 = scmp.lt.s32.totalorder %s23, 0
          %s252 = scalar_select %p251, %s23, 0
          %p253 = scmp.lt.s32.totalorder %s250, 3
          %s254 = scalar_select %p253, %s250, 3
          %s255 = smul.addr %s252, 4
          %s256 = sadd.s32 %s254, %s255
          %s257 = smul.addr %s256, 2
          %s258 = scalar_lea.vmem %s0, %s257
          %s259 = smul.u32 2, %s24
        $region44: #{tpu_custom_call.1} parent=39 // pred_fallthru
          _
      $region40: #{tpu_custom_call.1} parent=5 // pred_fallthru
        _
      %p260 = scmp.le.s32.totalorder 1, %s16
      %p261 = scmp.lt.s32.totalorder %s16, 3
      %p262 = pnand %p260, %p261
      %p263 = pneg %p262
      // Predicated region
      $region45: #{tpu_custom_call.1} parent=5 // pred_check
        _
      $region46: #{tpu_custom_call.1} parent=5 // pred_check_branch
        %265 = sbr.rel (%p262) target = $region48
      $region47: #{tpu_custom_call.1} parent=5 // pred_region
        %s266 = ssub.s32 %s16, 1
        %s267 = smul.u32 2, %s26
        %p268 = scmp.lt.s32.totalorder %s25, 0
        %s269 = scalar_select %p268, %s25, 0
        %p270 = scmp.lt.s32.totalorder %s267, 3
        %s271 = scalar_select %p270, %s267, 3
        %s272 = smul.addr %s269, 4
        %s273 = sadd.s32 %s271, %s272
        %s274 = smul.addr %s273, 2
        %s275 = scalar_lea.vmem %s0, %s274
        %p276 = pneg %p56
        %p277 = pneg %p53
        %p278 = pneg %p77
        %p279 = pneg %p74
        %p280 = pneg %p98
        %p281 = pneg %p95
        %p282 = pneg %p119
        %p283 = pneg %p116
        %p284 = pneg %p140
        %p285 = pneg %p137
        %p286 = pneg %p161
        %p287 = pneg %p158
        %p288 = pneg %p182
        %p289 = pneg %p179
        %p290 = pneg %p210
        %p291 = pneg %p207
        %s292 = sand.u32 %s197, 1
        %s293 = scalar_lea.sflag [#allocation3], %s292
        %s294 = sand.u32 %s197, 1
        %s295 = smul.addr %s294, 32
        %s296 = scalar_lea.vmem [#allocation2], %s295
        %s297 = smul.u32 2, %s26
        %p298 = scmp.lt.s32.totalorder %s25, 0
        %s299 = scalar_select %p298, %s25, 0
        %p300 = scmp.lt.s32.totalorder %s297, 3
        %s301 = scalar_select %p300, %s297, 3
        %s302 = smul.addr %s299, 4
        %s303 = sadd.s32 %s301, %s302
        %s304 = smul.addr %s303, 2
        %s305 = scalar_lea.vmem %s0, %s304
        %s306 = smul.u32 2, %s26
        %s307 = smul.u32 2, %s26
        %v309 = vld [vmem:[%s305] sm:$0xf]
        %v310 = vld [vmem:[%s1] sm:$0xf]
        %v311 = vld [vmem:[%s1 + $0x4] sm:$0xf]
        %v312 = vld [vmem:[%s1 + $0x8] sm:$0xf]
        %v313 = vld [vmem:[%s2] sm:$0xff]
        %v314 = vld [vmem:[%s2 + $0x8] sm:$0xff]
        %v315 = vld [vmem:[%s2 + $0x10] sm:$0xff]
        %317 = vset.pattern.permute.xlu0 0
        %318 = vperm.xlu0 %317, %v313
        %v319 = vpop.permute.xlu0 %318
        %322 = vset.pattern.permute.xlu0 0
        %323 = vperm.xlu0 %322, %v314
        %v324 = vpop.permute.xlu0 %323
        %327 = vset.pattern.permute.xlu0 0
        %328 = vperm.xlu0 %327, %v315
        %v329 = vpop.permute.xlu0 %328
        %v334 = vunpack.c.l.b16 %v310
        %v335 = vunpack.c.l.b16 %v311
        %v336 = vunpack.c.l.b16 %v312
        %v337 = vpack.c.b16 %v335, %v334
        %v338 = vpack.c.b16 %v336, %v336
        %v341 = vunpack.c.l.s4 1983009808
        %v342 = vunpack.c.0.s8 %v341
        %v343 = vlaneseq
        %v344 = vshrl.u32 %v343, 7
        %v345 = vsub.s32 %v342, %v344
        %v346 = vrot.slane %v309, %v345
        %v347 = vcombine.high %v346, %v346
        %vm348 = vcmask 31744
        %v350 = vsel %vm348, %v337, 0
        %v353 = vsel %vm348, %v338, 0
        %vm355 = vcmask 1041408
        %v357 = vsel %vm355, %v346, 0
        %v360 = vsel %vm355, %v347, 0
        %362 = vmatprep.subr.bf16.mxu0 %v360
        %363 = vmatpush1.bf16.msra.mxu0 %v357
        %364 = vmatprep.subr.bf16.mxu0 0
        %365 = vmatpush1.bf16.msra.mxu0 0
        %366 = vmatprep.subr.bf16.mxu0 0
        %367 = vmatpush1.bf16.msra.mxu0 0
        %368 = vmatprep.subr.bf16.mxu0 0
        %369 = vmatpush1.bf16.msra.mxu0 0
        %370 = vmatprep.subr.bf16.mxu0 0
        %371 = vmatpush1.bf16.msra.mxu0 0
        %372 = vmatprep.subr.bf16.mxu0 0
        %373 = vmatpush1.bf16.msra.mxu0 0
        %374 = vmatprep.subr.bf16.mxu0 0
        %375 = vmatpush1.bf16.msra.mxu0 0
        %376 = vmatprep.subr.bf16.mxu0 0
        %377 = vmatpush1.bf16.msra.mxu0 0
        %378 = vmatprep.subr.bf16.mxu0 0
        %379 = vmatpush1.bf16.msra.mxu0 0
        %380 = vmatprep.subr.bf16.mxu0 0
        %381 = vmatpush1.bf16.msra.mxu0 0
        %382 = vmatprep.subr.bf16.mxu0 0
        %383 = vmatpush1.bf16.msra.mxu0 0
        %384 = vmatprep.subr.bf16.mxu0 0
        %385 = vmatpush1.bf16.msra.mxu0 0
        %386 = vmatprep.subr.bf16.mxu0 0
        %387 = vmatpush1.bf16.msra.mxu0 0
        %388 = vmatprep.subr.bf16.mxu0 0
        %389 = vmatpush1.bf16.msra.mxu0 0
        %390 = vmatprep.subr.bf16.mxu0 0
        %391 = vmatpush1.bf16.msra.mxu0 0
        %392 = vmatprep.subr.bf16.mxu0 0
        %393 = vmatpush1.bf16.msra.mxu0 0
        %394 = vmatprep.mubr.bf16.mxu0 0
        %395 = vmatmul.mubr.bf16.gmra.mrb[0].mxu0 %v350
        %v396 = vpop.f32.mrb[0].mxu0
        %v397 = vadd.f32 %v319, %v396
        %v398 = vpop.f32.mrb[0].mxu0
        %v399 = vadd.f32 %v319, %v398
        %v400 = vpop.f32.mrb[0].mxu0
        %v401 = vadd.f32 %v324, %v400
        %v402 = vpop.f32.mrb[0].mxu0
        %v403 = vadd.f32 %v324, %v402
        %404 = vmatprep.mubr.bf16.mxu0 0
        %405 = vmatmul.mubr.bf16.gmra.mrb[0].mxu0 %v353
        %v406 = vpop.f32.mrb[0].mxu0
        %v407 = vadd.f32 %v329, %v406
        %v408 = vpop.f32.mrb[0].mxu0
        %v409 = vadd.f32 %v329, %v408
        %v410 = vpop.f32.mrb[0].mxu0
        %v411 = vpop.f32.mrb[0].mxu0
        %412 = vdwg.mxu0
        %vm413 = vcmp.ge.f32.partialorder %v397, 0.0
        %vm414 = vcmp.ge.f32.partialorder %v399, 0.0
        %v415 = vmul.f32 %v397, 0.2
        %v416 = vmul.f32 %v399, 0.2
        %v417 = vsel %vm413, %v397, %v415
        %v418 = vsel %vm414, %v399, %v416
        %v419 = vld [vmem:[%s3] sm:$0xf]
        %v420 = vpack.c.bf16 %v417, %v417
        %v421 = vpack.c.bf16 %v418, %v418
        %v422 = vld [vmem:[%s4] sm:$0xff]
        %424 = vset.pattern.permute.xlu0 0
        %425 = vperm.xlu0 %424, %v422
        %v426 = vpop.permute.xlu0 %425
        %vm428 = vcmask 64512
        %v430 = vsel %vm428, %v419, 0
        %vm432 = vcmask 1043456
        %v434 = vsel %vm432, %v420, 0
        %v437 = vsel %vm432, %v421, 0
        %439 = vmatprep.subr.bf16.mxu0 %v437
        %440 = vmatpush1.bf16.msra.mxu0 %v434
        %441 = vmatprep.subr.bf16.mxu0 0
        %442 = vmatpush1.bf16.msra.mxu0 0
        %443 = vmatprep.subr.bf16.mxu0 0
        %444 = vmatpush1.bf16.msra.mxu0 0
        %445 = vmatprep.subr.bf16.mxu0 0
        %446 = vmatpush1.bf16.msra.mxu0 0
        %447 = vmatprep.subr.bf16.mxu0 0
        %448 = vmatpush1.bf16.msra.mxu0 0
        %449 = vmatprep.subr.bf16.mxu0 0
        %450 = vmatpush1.bf16.msra.mxu0 0
        %451 = vmatprep.subr.bf16.mxu0 0
        %452 = vmatpush1.bf16.msra.mxu0 0
        %453 = vmatprep.subr.bf16.mxu0 0
        %454 = vmatpush1.bf16.msra.mxu0 0
        %455 = vmatprep.subr.bf16.mxu0 0
        %456 = vmatpush1.bf16.msra.mxu0 0
        %457 = vmatprep.subr.bf16.mxu0 0
        %458 = vmatpush1.bf16.msra.mxu0 0
        %459 = vmatprep.subr.bf16.mxu0 0
        %460 = vmatpush1.bf16.msra.mxu0 0
        %461 = vmatprep.subr.bf16.mxu0 0
        %462 = vmatpush1.bf16.msra.mxu0 0
        %463 = vmatprep.subr.bf16.mxu0 0
        %464 = vmatpush1.bf16.msra.mxu0 0
        %465 = vmatprep.subr.bf16.mxu0 0
        %466 = vmatpush1.bf16.msra.mxu0 0
        %467 = vmatprep.subr.bf16.mxu0 0
        %468 = vmatpush1.bf16.msra.mxu0 0
        %469 = vmatprep.subr.bf16.mxu0 0
        %470 = vmatpush1.bf16.msra.mxu0 0
        %471 = vmatprep.mubr.bf16.mxu0 0
        %472 = vmatmul.mubr.bf16.gmra.mrb[0].mxu0 %v430
        %v473 = vpop.f32.mrb[0].mxu0
        %v474 = vadd.f32 %v426, %v473
        %v475 = vpop.f32.mrb[0].mxu0
        %v476 = vadd.f32 %v426, %v475
        %v477 = vpop.f32.mrb[0].mxu0
        %v478 = vpop.f32.mrb[0].mxu0
        %479 = vdwg.mxu0
        %vm480 = vcmp.ge.f32.partialorder %v474, 0.0
        %vm481 = vcmp.ge.f32.partialorder %v476, 0.0
        %v482 = vmul.f32 %v474, 0.2
        %v483 = vmul.f32 %v476, 0.2
        %v484 = vsel %vm480, %v474, %v482
        %v485 = vsel %vm481, %v476, %v483
        %v486 = vld [vmem:[%s5] sm:$0xf]
        %v487 = vld [vmem:[%s5 + $0x4] sm:$0xf]
        %v488 = vpack.c.bf16 %v484, %v484
        %v489 = vpack.c.bf16 %v485, %v485
        %v490 = vld [vmem:[%s6] sm:$0xff]
        %v491 = vld [vmem:[%s6 + $0x8] sm:$0xff]
        %493 = vset.pattern.permute.xlu0 0
        %494 = vperm.xlu0 %493, %v490
        %v495 = vpop.permute.xlu0 %494
        %498 = vset.pattern.permute.xlu0 0
        %499 = vperm.xlu0 %498, %v491
        %v500 = vpop.permute.xlu0 %499
        %v504 = vunpack.c.l.b16 %v486
        %v505 = vunpack.c.l.b16 %v487
        %v506 = vpack.c.b16 %v505, %v504
        %v508 = vsel %vm428, %v506, 0
        %v511 = vsel %vm432, %v488, 0
        %v514 = vsel %vm432, %v489, 0
        %516 = vmatprep.subr.bf16.mxu0 %v514
        %517 = vmatpush1.bf16.msra.mxu0 %v511
        %518 = vmatprep.subr.bf16.mxu0 0
        %519 = vmatpush1.bf16.msra.mxu0 0
        %520 = vmatprep.subr.bf16.mxu0 0
        %521 = vmatpush1.bf16.msra.mxu0 0
        %522 = vmatprep.subr.bf16.mxu0 0
        %523 = vmatpush1.bf16.msra.mxu0 0
        %524 = vmatprep.subr.bf16.mxu0 0
        %525 = vmatpush1.bf16.msra.mxu0 0
        %526 = vmatprep.subr.bf16.mxu0 0
        %527 = vmatpush1.bf16.msra.mxu0 0
        %528 = vmatprep.subr.bf16.mxu0 0
        %529 = vmatpush1.bf16.msra.mxu0 0
        %530 = vmatprep.subr.bf16.mxu0 0
        %531 = vmatpush1.bf16.msra.mxu0 0
        %532 = vmatprep.subr.bf16.mxu0 0
        %533 = vmatpush1.bf16.msra.mxu0 0
        %534 = vmatprep.subr.bf16.mxu0 0
        %535 = vmatpush1.bf16.msra.mxu0 0
        %536 = vmatprep.subr.bf16.mxu0 0
        %537 = vmatpush1.bf16.msra.mxu0 0
        %538 = vmatprep.subr.bf16.mxu0 0
        %539 = vmatpush1.bf16.msra.mxu0 0
        %540 = vmatprep.subr.bf16.mxu0 0
        %541 = vmatpush1.bf16.msra.mxu0 0
        %542 = vmatprep.subr.bf16.mxu0 0
        %543 = vmatpush1.bf16.msra.mxu0 0
        %544 = vmatprep.subr.bf16.mxu0 0
        %545 = vmatpush1.bf16.msra.mxu0 0
        %546 = vmatprep.subr.bf16.mxu0 0
        %547 = vmatpush1.bf16.msra.mxu0 0
        %548 = vmatprep.mubr.bf16.mxu0 0
        %549 = vmatmul.mubr.bf16.gmra.mrb[0].mxu0 %v508
        %v550 = vpop.f32.mrb[0].mxu0
        %v551 = vadd.f32 %v495, %v550
        %v552 = vpop.f32.mrb[0].mxu0
        %v553 = vadd.f32 %v495, %v552
        %v554 = vpop.f32.mrb[0].mxu0
        %v555 = vadd.f32 %v500, %v554
        %v556 = vpop.f32.mrb[0].mxu0
        %v557 = vadd.f32 %v500, %v556
        %558 = vdwg.mxu0
        %v559 = vadd.f32 %v551, %v401
        %v560 = vadd.f32 %v553, %v403
        %v561 = vadd.f32 %v555, %v407
        %v562 = vadd.f32 %v557, %v409
        %vm563 = vcmp.ge.f32.partialorder %v559, 0.0
        %vm564 = vcmp.ge.f32.partialorder %v560, 0.0
        %vm565 = vcmp.ge.f32.partialorder %v561, 0.0
        %vm566 = vcmp.ge.f32.partialorder %v562, 0.0
        %v567 = vmul.f32 %v559, 0.2
        %v568 = vmul.f32 %v560, 0.2
        %v569 = vmul.f32 %v561, 0.2
        %v570 = vmul.f32 %v562, 0.2
        %v571 = vsel %vm563, %v559, %v567
        %v572 = vsel %vm564, %v560, %v568
        %v573 = vsel %vm565, %v561, %v569
        %v574 = vsel %vm566, %v562, %v570
        %575 = vst [vmem:[%s296] sm:$0xff] %v571
        %576 = vst [vmem:[%s296 + $0x8] sm:$0xff] %v572
        %577 = vst [vmem:[%s296 + $0x10] sm:$0xff] %v573
        %578 = vst [vmem:[%s296 + $0x18] sm:$0xff] %v574
        %s579 = sand.u32 %s197, 1
        %s580 = scalar_lea.sflag [#allocation3], %s579
        %s581 = sand.u32 %s197, 1
        %s582 = smul.addr %s581, 32
        %s583 = scalar_lea.vmem [#allocation2], %s582
        // Predicated region
        $region49: #{tpu_custom_call.1} parent=47 // pred_check
          %p584 = pneg %p207
        $region50: #{tpu_custom_call.1} parent=47 // pred_check_branch
          %586 = sbr.rel (%p584) target = $region52
        $region51: #{tpu_custom_call.1} parent=47 // pred_region
          %s587 = smul.u32 2, %s26
          %s589 = ssub.s32 512, 512
          %590 = vsyncadd %s580, %s589
          %s591 = smul.addr %s25, 8
          %s592 = sadd.s32 %s587, %s591
          %s593 = smul.addr %s592, 128
          %s594 = scalar_lea.hbm %s7, %s593
          %s595 = sshll.u32 %s583, 4
          %s596 = int_to_ptr.vmem [resolvable:$true] %s595
          %601 = dma.vmem_to_hbm [thread:$0]  %s596, 512, %s594, %s580, 256, 512, 16
        $region52: #{tpu_custom_call.1} parent=47 // pred_fallthru
          _
      $region48: #{tpu_custom_call.1} parent=5 // pred_fallthru
        _
      %p602 = scmp.le.s32.totalorder 2, %s16
      // Predicated region
      $region53: #{tpu_custom_call.1} parent=5 // pred_check
        %p603 = pneg %p602
      $region54: #{tpu_custom_call.1} parent=5 // pred_check_branch
        %605 = sbr.rel (%p603) target = $region56
      $region55: #{tpu_custom_call.1} parent=5 // pred_region
        %s606 = ssub.s32 %s16, 2
        // Predicated region
        $region57: #{tpu_custom_call.1} parent=55 // pred_check
          %p607 = pneg %p213
        $region58: #{tpu_custom_call.1} parent=55 // pred_check_branch
          %609 = sbr.rel (%p607) target = $region60
        $region59: #{tpu_custom_call.1} parent=55 // pred_region
          %s610 = sand.u32 %s198, 1
          %s611 = scalar_lea.sflag [#allocation3], %s610
          %s612 = sand.u32 %s198, 1
          %s613 = smul.addr %s612, 32
          %s614 = scalar_lea.vmem [#allocation2], %s613
          %615 = dma.done %s611, 512
        $region60: #{tpu_custom_call.1} parent=55 // pred_fallthru
          _
      $region56: #{tpu_custom_call.1} parent=5 // pred_fallthru
        _
    $region6: #{tpu_custom_call.1} parent=1 // loop_footer
      %s20 = sadd.s32 1, %s16
    $region7: #{tpu_custom_call.1} parent=1 // loop_footer_branch
      %15 = sbr.rel target = $region3
    $region8: #{tpu_custom_call.1} parent=1 // loop_exit
      _
    %616 = vsyncpa [#allocation3], 1
    %s617 = scalar_lea.sflag [#allocation3], 1
    %618 = vsyncpa %s617, 1

// kernel: tpu_custom_call.1
$region0: #{tpu_custom_call.1}
  #allocation0 [shape = 'u32[]', space=smem, size = 0x4, offset = 0x4, fixed_abs, tag = 'smem constant byte address 0x4 - core index']
  #allocation1 [shape = 'u32[144,128]{1,0:T(1,128)}', space=vmem, size = 0x12000, scoped, tag = 'internal scratch']
  %s0 = inlined_call_operand.vmem [shape: bf16[1,4,512], index: 0, kind: input, shape index: {}]
  %s1 = inlined_call_operand.vmem [shape: bf16[24,4], index: 1, kind: input, shape index: {}]
  %s2 = inlined_call_operand.vmem [shape: f32[24,1], index: 2, kind: input, shape index: {}]
  %s3 = inlined_call_operand.vmem [shape: bf16[8,8], index: 3, kind: input, shape index: {}]
  %s4 = inlined_call_operand.vmem [shape: f32[8,1], index: 4, kind: input, shape index: {}]
  %s5 = inlined_call_operand.vmem [shape: bf16[16,8], index: 5, kind: input, shape index: {}]
  %s6 = inlined_call_operand.vmem [shape: f32[16,1], index: 6, kind: input, shape index: {}]
  %s7 = inlined_call_operand.hbm [shape: f32[1,16,512], index: 7, kind: output, shape index: {}]
  %s8 = sld [smem:[#allocation0]]
  $region61: #{tpu_custom_call.1} parent=0
    _
  %s10 = ssub.s32 1, %s8
  %s11 = scalar_select 0, %s10, %s8
  $region1: #{tpu_custom_call.1} parent=0
    #allocation2 [shape = 'u8[32768]{0}', space=vmem, size = 0x8000, scoped, tag = 'output window, operand 0']
    #allocation3 [shape = 's32[2]{0}', space=sflag, size = 0x8, scoped, tag = 'scoped memory for tpu_custom_call.1']
    %12 = vsyncpa [#allocation3], 0
    %s13 = scalar_lea.sflag [#allocation3], 1
    %14 = vsyncpa %s13, 0
    loop: start=0, step=1, limit=4
    $region2: #{tpu_custom_call.1} parent=1 // loop_pre_header
      _
    $region3: #{tpu_custom_call.1} parent=1 // loop_header
      %s16 = sphi 0, %s20
      %p17 = scmp.ge.s32.totalorder %s16, 4
      %s23 = sphi 0, %s35
      %s24 = sphi 0, %s31
      %s25 = sphi 0, %s23
      %s26 = sphi 0, %s24
      %s27 = sphi 0, %s25
      %s28 = sphi 0, %s26
      %s40 = sphi 0, %s42
      %s43 = sphi 0, %s40
      %s44 = sphi 0, %s43
      %s60 = sphi 0, %s44
      %s64 = sphi 0, %s64
      %s66 = sphi 0, %s64
      %s67 = sphi 0, %s66
      %s81 = sphi 0, %s67
      %s85 = sphi 0, %s85
      %s87 = sphi 0, %s85
      %s88 = sphi 0, %s87
      %s102 = sphi 0, %s88
      %s106 = sphi 0, %s106
      %s108 = sphi 0, %s106
      %s109 = sphi 0, %s108
      %s123 = sphi 0, %s109
      %s127 = sphi 0, %s127
      %s129 = sphi 0, %s127
      %s130 = sphi 0, %s129
      %s144 = sphi 0, %s130
      %s148 = sphi 0, %s148
      %s150 = sphi 0, %s148
      %s151 = sphi 0, %s150
      %s165 = sphi 0, %s151
      %s169 = sphi 0, %s169
      %s171 = sphi 0, %s169
      %s172 = sphi 0, %s171
      %s186 = sphi 0, %s172
      %s194 = sphi 0, %s196
      %s197 = sphi 0, %s194
      %s198 = sphi 0, %s197
      %s214 = sphi 0, %s198
    $region4: #{tpu_custom_call.1} parent=1 // loop_header_branch
      %19 = sbr.rel (%p17) target = $region8
    $region5: #{tpu_custom_call.1} parent=1 // loop_body
      %s21 = ssub.s32 %s16, 1
      %s22 = ssub.s32 %s16, 2
      %s29 = sadd.s32 1, %s24
      %p30 = scmp.ge.s32.totalorder %s29, 2
      %s31 = scalar_select %p30, 0, %s29
      %s32 = sadd.s32 1, %s23
      %s33 = scalar_select %p30, %s32, %s23
      %p34 = scmp.ge.s32.totalorder %s33, 1
      %s35 = scalar_select %p34, 0, %s33
      %s36 = ssub.s32 %s23, %s35
      %s37 = ssub.s32 %s24, %s31
      %s38 = sor.u32 %s36, %s37
      %p39 = scmp.eq.s32.totalorder %s38, 0
      %s41 = sadd.s32 %s40, 1
      %s42 = scalar_select %p39, %s40, %s41
      %p45 = pneg %p39
      %p46 = scmp.eq.s32.totalorder %s16, 1
      %p47 = por %p45, %p46
      %p48 = scmp.ne.s32.totalorder %s40, %s43
      %p49 = scmp.eq.s32.totalorder %s16, 0
      %p50 = por %p48, %p49
      %p51 = scmp.ne.s32.totalorder %s40, %s43
      %p52 = scmp.eq.s32.totalorder %s21, 1
      %p53 = por %p51, %p52
      %p54 = scmp.ne.s32.totalorder %s43, %s44
      %p55 = scmp.eq.s32.totalorder %s21, 0
      %p56 = por %p54, %p55
      %p57 = scmp.ne.s32.totalorder %s43, %s44
      %p58 = scmp.eq.s32.totalorder %s22, 1
      %p59 = por %p57, %p58
      %p61 = scmp.ne.s32.totalorder %s44, %s60
      %p62 = scmp.eq.s32.totalorder %s22, 0
      %p63 = por %p61, %p62
      %s65 = sadd.s32 %s64, 1
      %p68 = scmp.eq.s32.totalorder %s16, 1
      %p69 = scmp.ne.s32.totalorder %s64, %s66
      %p70 = scmp.eq.s32.totalorder %s16, 0
      %p71 = por %p69, %p70
      %p72 = scmp.ne.s32.totalorder %s64, %s66
      %p73 = scmp.eq.s32.totalorder %s21, 1
      %p74 = por %p72, %p73
      %p75 = scmp.ne.s32.totalorder %s66, %s67
      %p76 = scmp.eq.s32.totalorder %s21, 0
      %p77 = por %p75, %p76
      %p78 = scmp.ne.s32.totalorder %s66, %s67
      %p79 = scmp.eq.s32.totalorder %s22, 1
      %p80 = por %p78, %p79
      %p82 = scmp.ne.s32.totalorder %s67, %s81
      %p83 = scmp.eq.s32.totalorder %s22, 0
      %p84 = por %p82, %p83
      %s86 = sadd.s32 %s85, 1
      %p89 = scmp.eq.s32.totalorder %s16, 1
      %p90 = scmp.ne.s32.totalorder %s85, %s87
      %p91 = scmp.eq.s32.totalorder %s16, 0
      %p92 = por %p90, %p91
      %p93 = scmp.ne.s32.totalorder %s85, %s87
      %p94 = scmp.eq.s32.totalorder %s21, 1
      %p95 = por %p93, %p94
      %p96 = scmp.ne.s32.totalorder %s87, %s88
      %p97 = scmp.eq.s32.totalorder %s21, 0
      %p98 = por %p96, %p97
      %p99 = scmp.ne.s32.totalorder %s87, %s88
      %p100 = scmp.eq.s32.totalorder %s22, 1
      %p101 = por %p99, %p100
      %p103 = scmp.ne.s32.totalorder %s88, %s102
      %p104 = scmp.eq.s32.totalorder %s22, 0
      %p105 = por %p103, %p104
      %s107 = sadd.s32 %s106, 1
      %p110 = scmp.eq.s32.totalorder %s16, 1
      %p111 = scmp.ne.s32.totalorder %s106, %s108
      %p112 = scmp.eq.s32.totalorder %s16, 0
      %p113 = por %p111, %p112
      %p114 = scmp.ne.s32.totalorder %s106, %s108
      %p115 = scmp.eq.s32.totalorder %s21, 1
      %p116 = por %p114, %p115
      %p117 = scmp.ne.s32.totalorder %s108, %s109
      %p118 = scmp.eq.s32.totalorder %s21, 0
      %p119 = por %p117, %p118
      %p120 = scmp.ne.s32.totalorder %s108, %s109
      %p121 = scmp.eq.s32.totalorder %s22, 1
      %p122 = por %p120, %p121
      %p124 = scmp.ne.s32.totalorder %s109, %s123
      %p125 = scmp.eq.s32.totalorder %s22, 0
      %p126 = por %p124, %p125
      %s128 = sadd.s32 %s127, 1
      %p131 = scmp.eq.s32.totalorder %s16, 1
      %p132 = scmp.ne.s32.totalorder %s127, %s129
      %p133 = scmp.eq.s32.totalorder %s16, 0
      %p134 = por %p132, %p133
      %p135 = scmp.ne.s32.totalorder %s127, %s129
      %p136 = scmp.eq.s32.totalorder %s21, 1
      %p137 = por %p135, %p136
      %p138 = scmp.ne.s32.totalorder %s129, %s130
      %p139 = scmp.eq.s32.totalorder %s21, 0
      %p140 = por %p138, %p139
      %p141 = scmp.ne.s32.totalorder %s129, %s130
      %p142 = scmp.eq.s32.totalorder %s22, 1
      %p143 = por %p141, %p142
      %p145 = scmp.ne.s32.totalorder %s130, %s144
      %p146 = scmp.eq.s32.totalorder %s22, 0
      %p147 = por %p145, %p146
      %s149 = sadd.s32 %s148, 1
      %p152 = scmp.eq.s32.totalorder %s16, 1
      %p153 = scmp.ne.s32.totalorder %s148, %s150
      %p154 = scmp.eq.s32.totalorder %s16, 0
      %p155 = por %p153, %p154
      %p156 = scmp.ne.s32.totalorder %s148, %s150
      %p157 = scmp.eq.s32.totalorder %s21, 1
      %p158 = por %p156, %p157
      %p159 = scmp.ne.s32.totalorder %s150, %s151
      %p160 = scmp.eq.s32.totalorder %s21, 0
      %p161 = por %p159, %p160
      %p162 = scmp.ne.s32.totalorder %s150, %s151
      %p163 = scmp.eq.s32.totalorder %s22, 1
      %p164 = por %p162, %p163
      %p166 = scmp.ne.s32.totalorder %s151, %s165
      %p167 = scmp.eq.s32.totalorder %s22, 0
      %p168 = por %p166, %p167
      %s170 = sadd.s32 %s169, 1
      %p173 = scmp.eq.s32.totalorder %s16, 1
      %p174 = scmp.ne.s32.totalorder %s169, %s171
      %p175 = scmp.eq.s32.totalorder %s16, 0
      %p176 = por %p174, %p175
      %p177 = scmp.ne.s32.totalorder %s169, %s171
      %p178 = scmp.eq.s32.totalorder %s21, 1
      %p179 = por %p177, %p178
      %p180 = scmp.ne.s32.totalorder %s171, %s172
      %p181 = scmp.eq.s32.totalorder %s21, 0
      %p182 = por %p180, %p181
      %p183 = scmp.ne.s32.totalorder %s171, %s172
      %p184 = scmp.eq.s32.totalorder %s22, 1
      %p185 = por %p183, %p184
      %p187 = scmp.ne.s32.totalorder %s172, %s186
      %p188 = scmp.eq.s32.totalorder %s22, 0
      %p189 = por %p187, %p188
      %s190 = ssub.s32 %s23, %s35
      %s191 = ssub.s32 %s24, %s31
      %s192 = sor.u32 %s190, %s191
      %p193 = scmp.eq.s32.totalorder %s192, 0
      %s195 = sadd.s32 %s194, 1
      %s196 = scalar_select %p193, %s194, %s195
      %p199 = pneg %p193
      %p200 = scmp.eq.s32.totalorder %s16, 1
      %p201 = por %p199, %p200
      %p202 = scmp.ne.s32.totalorder %s194, %s197
      %p203 = scmp.eq.s32.totalorder %s16, 0
      %p204 = por %p202, %p203
      %p205 = scmp.ne.s32.totalorder %s194, %s197
      %p206 = scmp.eq.s32.totalorder %s21, 1
      %p207 = por %p205, %p206
      %p208 = scmp.ne.s32.totalorder %s197, %s198
      %p209 = scmp.eq.s32.totalorder %s21, 0
      %p210 = por %p208, %p209
      %p211 = scmp.ne.s32.totalorder %s197, %s198
      %p212 = scmp.eq.s32.totalorder %s22, 1
      %p213 = por %p211, %p212
      %p215 = scmp.ne.s32.totalorder %s198, %s214
      %p216 = scmp.eq.s32.totalorder %s22, 0
      %p217 = por %p215, %p216
      %p218 = scmp.le.s32.totalorder 1, %s16
      %p219 = scmp.lt.s32.totalorder %s16, 3
      %p220 = pnand %p218, %p219
      %p221 = pneg %p220
      // Predicated region
      $region9: #{tpu_custom_call.1} parent=5 // pred_check
        _
      $region10: #{tpu_custom_call.1} parent=5 // pred_check_branch
        %223 = sbr.rel (%p220) target = $region12
      $region11: #{tpu_custom_call.1} parent=5 // pred_region
        %s224 = ssub.s32 %s16, 1
        // Predicated region
        $region13: #{tpu_custom_call.1} parent=11 // pred_check
          %p225 = pneg %p77
        $region14: #{tpu_custom_call.1} parent=11 // pred_check_branch
          %227 = sbr.rel (%p225) target = $region16
        $region15: #{tpu_custom_call.1} parent=11 // pred_region
          _
        $region16: #{tpu_custom_call.1} parent=11 // pred_fallthru
          _
        // Predicated region
        $region17: #{tpu_custom_call.1} parent=11 // pred_check
          %p228 = pneg %p98
        $region18: #{tpu_custom_call.1} parent=11 // pred_check_branch
          %230 = sbr.rel (%p228) target = $region20
        $region19: #{tpu_custom_call.1} parent=11 // pred_region
          _
        $region20: #{tpu_custom_call.1} parent=11 // pred_fallthru
          _
        // Predicated region
        $region21: #{tpu_custom_call.1} parent=11 // pred_check
          %p231 = pneg %p119
        $region22: #{tpu_custom_call.1} parent=11 // pred_check_branch
          %233 = sbr.rel (%p231) target = $region24
        $region23: #{tpu_custom_call.1} parent=11 // pred_region
          _
        $region24: #{tpu_custom_call.1} parent=11 // pred_fallthru
          _
        // Predicated region
        $region25: #{tpu_custom_call.1} parent=11 // pred_check
          %p234 = pneg %p140
        $region26: #{tpu_custom_call.1} parent=11 // pred_check_branch
          %236 = sbr.rel (%p234) target = $region28
        $region27: #{tpu_custom_call.1} parent=11 // pred_region
          _
        $region28: #{tpu_custom_call.1} parent=11 // pred_fallthru
          _
        // Predicated region
        $region29: #{tpu_custom_call.1} parent=11 // pred_check
          %p237 = pneg %p161
        $region30: #{tpu_custom_call.1} parent=11 // pred_check_branch
          %239 = sbr.rel (%p237) target = $region32
        $region31: #{tpu_custom_call.1} parent=11 // pred_region
          _
        $region32: #{tpu_custom_call.1} parent=11 // pred_fallthru
          _
        // Predicated region
        $region33: #{tpu_custom_call.1} parent=11 // pred_check
          %p240 = pneg %p182
        $region34: #{tpu_custom_call.1} parent=11 // pred_check_branch
          %242 = sbr.rel (%p240) target = $region36
        $region35: #{tpu_custom_call.1} parent=11 // pred_region
          _
        $region36: #{tpu_custom_call.1} parent=11 // pred_fallthru
          _
      $region12: #{tpu_custom_call.1} parent=5 // pred_fallthru
        _
      %p243 = scmp.lt.s32.totalorder %s16, 2
      // Predicated region
      $region37: #{tpu_custom_call.1} parent=5 // pred_check
        %p244 = pneg %p243
      $region38: #{tpu_custom_call.1} parent=5 // pred_check_branch
        %246 = sbr.rel (%p244) target = $region40
      $region39: #{tpu_custom_call.1} parent=5 // pred_region
        // Predicated region
        $region41: #{tpu_custom_call.1} parent=39 // pred_check
          %p247 = pneg %p50
        $region42: #{tpu_custom_call.1} parent=39 // pred_check_branch
          %249 = sbr.rel (%p247) target = $region44
        $region43: #{tpu_custom_call.1} parent=39 // pred_region
          %s250 = smul.u32 2, %s24
          %p251 = scmp.lt.s32.totalorder %s23, 0
          %s252 = scalar_select %p251, %s23, 0
          %p253 = scmp.lt.s32.totalorder %s250, 3
          %s254 = scalar_select %p253, %s250, 3
          %s255 = smul.addr %s252, 4
          %s256 = sadd.s32 %s254, %s255
          %s257 = smul.addr %s256, 2
          %s258 = scalar_lea.vmem %s0, %s257
          %s259 = smul.u32 2, %s24
        $region44: #{tpu_custom_call.1} parent=39 // pred_fallthru
          _
      $region40: #{tpu_custom_call.1} parent=5 // pred_fallthru
        _
      %p260 = scmp.le.s32.totalorder 1, %s16
      %p261 = scmp.lt.s32.totalorder %s16, 3
      %p262 = pnand %p260, %p261
      %p263 = pneg %p262
      // Predicated region
      $region45: #{tpu_custom_call.1} parent=5 // pred_check
        _
      $region46: #{tpu_custom_call.1} parent=5 // pred_check_branch
        %265 = sbr.rel (%p262) target = $region48
      $region47: #{tpu_custom_call.1} parent=5 // pred_region
        %s266 = ssub.s32 %s16, 1
        %s267 = smul.u32 2, %s26
        %p268 = scmp.lt.s32.totalorder %s25, 0
        %s269 = scalar_select %p268, %s25, 0
        %p270 = scmp.lt.s32.totalorder %s267, 3
        %s271 = scalar_select %p270, %s267, 3
        %s272 = smul.addr %s269, 4
        %s273 = sadd.s32 %s271, %s272
        %s274 = smul.addr %s273, 2
        %s275 = scalar_lea.vmem %s0, %s274
        %p276 = pneg %p56
        %p277 = pneg %p53
        %p278 = pneg %p77
        %p279 = pneg %p74
        %p280 = pneg %p98
        %p281 = pneg %p95
        %p282 = pneg %p119
        %p283 = pneg %p116
        %p284 = pneg %p140
        %p285 = pneg %p137
        %p286 = pneg %p161
        %p287 = pneg %p158
        %p288 = pneg %p182
        %p289 = pneg %p179
        %p290 = pneg %p210
        %p291 = pneg %p207
        %s292 = sand.u32 %s197, 1
        %s293 = scalar_lea.sflag [#allocation3], %s292
        %s294 = sand.u32 %s197, 1
        %s295 = smul.addr %s294, 32
        %s296 = scalar_lea.vmem [#allocation2], %s295
        %s297 = smul.u32 2, %s26
        %p298 = scmp.lt.s32.totalorder %s25, 0
        %s299 = scalar_select %p298, %s25, 0
        %p300 = scmp.lt.s32.totalorder %s297, 3
        %s301 = scalar_select %p300, %s297, 3
        %s302 = smul.addr %s299, 4
        %s303 = sadd.s32 %s301, %s302
        %s304 = smul.addr %s303, 2
        %s305 = scalar_lea.vmem %s0, %s304
        %s306 = smul.u32 2, %s26
        %s307 = smul.u32 2, %s26
        %v309 = vld [vmem:[%s305] sm:$0xf]
        %v310 = vld [vmem:[%s1] sm:$0xf]
        %v311 = vld [vmem:[%s1 + $0x4] sm:$0xf]
        %v312 = vld [vmem:[%s1 + $0x8] sm:$0xf]
        %v313 = vld [vmem:[%s2] sm:$0xff]
        %v314 = vld [vmem:[%s2 + $0x8] sm:$0xff]
        %v315 = vld [vmem:[%s2 + $0x10] sm:$0xff]
        %317 = vset.pattern.permute.xlu0 0
        %318 = vperm.xlu0 %317, %v313
        %v319 = vpop.permute.xlu0 %318
        %322 = vset.pattern.permute.xlu0 0
        %323 = vperm.xlu0 %322, %v314
        %v324 = vpop.permute.xlu0 %323
        %327 = vset.pattern.permute.xlu0 0
        %328 = vperm.xlu0 %327, %v315
        %v329 = vpop.permute.xlu0 %328
        %v334 = vunpack.c.l.b16 %v310
        %v335 = vunpack.c.l.b16 %v311
        %v336 = vunpack.c.l.b16 %v312
        %v337 = vpack.c.b16 %v335, %v334
        %v338 = vpack.c.b16 %v336, %v336
        %v341 = vunpack.c.l.s4 1983009808
        %v342 = vunpack.c.0.s8 %v341
        %v343 = vlaneseq
        %v344 = vshrl.u32 %v343, 7
        %v345 = vsub.s32 %v342, %v344
        %v346 = vrot.slane %v309, %v345
        %v347 = vcombine.high %v346, %v346
        %vm348 = vcmask 31744
        %v350 = vsel %vm348, %v337, 0
        %v353 = vsel %vm348, %v338, 0
        %vm355 = vcmask 1041408
        %v357 = vsel %vm355, %v346, 0
        %v360 = vsel %vm355, %v347, 0
        %362 = vmatprep.subr.bf16.mxu0 %v360
        %363 = vmatpush1.bf16.msra.mxu0 %v357
        %364 = vmatprep.subr.bf16.mxu0 0
        %365 = vmatpush1.bf16.msra.mxu0 0
        %366 = vmatprep.subr.bf16.mxu0 0
        %367 = vmatpush1.bf16.msra.mxu0 0
        %368 = vmatprep.subr.bf16.mxu0 0
        %369 = vmatpush1.bf16.msra.mxu0 0
        %370 = vmatprep.subr.bf16.mxu0 0
        %371 = vmatpush1.bf16.msra.mxu0 0
        %372 = vmatprep.subr.bf16.mxu0 0
        %373 = vmatpush1.bf16.msra.mxu0 0
        %374 = vmatprep.subr.bf16.mxu0 0
        %375 = vmatpush1.bf16.msra.mxu0 0
        %376 = vmatprep.subr.bf16.mxu0 0
        %377 = vmatpush1.bf16.msra.mxu0 0
        %378 = vmatprep.subr.bf16.mxu0 0
        %379 = vmatpush1.bf16.msra.mxu0 0
        %380 = vmatprep.subr.bf16.mxu0 0
        %381 = vmatpush1.bf16.msra.mxu0 0
        %382 = vmatprep.subr.bf16.mxu0 0
        %383 = vmatpush1.bf16.msra.mxu0 0
        %384 = vmatprep.subr.bf16.mxu0 0
        %385 = vmatpush1.bf16.msra.mxu0 0
        %386 = vmatprep.subr.bf16.mxu0 0
        %387 = vmatpush1.bf16.msra.mxu0 0
        %388 = vmatprep.subr.bf16.mxu0 0
        %389 = vmatpush1.bf16.msra.mxu0 0
        %390 = vmatprep.subr.bf16.mxu0 0
        %391 = vmatpush1.bf16.msra.mxu0 0
        %392 = vmatprep.subr.bf16.mxu0 0
        %393 = vmatpush1.bf16.msra.mxu0 0
        %394 = vmatprep.mubr.bf16.mxu0 0
        %395 = vmatmul.mubr.bf16.gmra.mrb[0].mxu0 %v350
        %v396 = vpop.f32.mrb[0].mxu0
        %v397 = vadd.f32 %v319, %v396
        %v398 = vpop.f32.mrb[0].mxu0
        %v399 = vadd.f32 %v319, %v398
        %v400 = vpop.f32.mrb[0].mxu0
        %v401 = vadd.f32 %v324, %v400
        %v402 = vpop.f32.mrb[0].mxu0
        %v403 = vadd.f32 %v324, %v402
        %404 = vmatprep.mubr.bf16.mxu0 0
        %405 = vmatmul.mubr.bf16.gmra.mrb[0].mxu0 %v353
        %v406 = vpop.f32.mrb[0].mxu0
        %v407 = vadd.f32 %v329, %v406
        %v408 = vpop.f32.mrb[0].mxu0
        %v409 = vadd.f32 %v329, %v408
        %v410 = vpop.f32.mrb[0].mxu0
        %v411 = vpop.f32.mrb[0].mxu0
        %412 = vdwg.mxu0
        %vm413 = vcmp.ge.f32.partialorder %v397, 0.0
        %vm414 = vcmp.ge.f32.partialorder %v399, 0.0
        %v415 = vmul.f32 %v397, 0.2
        %v416 = vmul.f32 %v399, 0.2
        %v417 = vsel %vm413, %v397, %v415
        %v418 = vsel %vm414, %v399, %v416
        %v419 = vld [vmem:[%s3] sm:$0xf]
        %v420 = vpack.c.bf16 %v417, %v417
        %v421 = vpack.c.bf16 %v418, %v418
        %v422 = vld [vmem:[%s4] sm:$0xff]
        %424 = vset.pattern.permute.xlu0 0
        %425 = vperm.xlu0 %424, %v422
        %v426 = vpop.permute.xlu0 %425
        %vm428 = vcmask 64512
        %v430 = vsel %vm428, %v419, 0
        %vm432 = vcmask 1043456
        %v434 = vsel %vm432, %v420, 0
        %v437 = vsel %vm432, %v421, 0
        %439 = vmatprep.subr.bf16.mxu0 %v437
        %440 = vmatpush1.bf16.msra.mxu0 %v434
        %441 = vmatprep.subr.bf16.mxu0 0
        %442 = vmatpush1.bf16.msra.mxu0 0
        %443 = vmatprep.subr.bf16.mxu0 0
        %444 = vmatpush1.bf16.msra.mxu0 0
        %445 = vmatprep.subr.bf16.mxu0 0
        %446 = vmatpush1.bf16.msra.mxu0 0
        %447 = vmatprep.subr.bf16.mxu0 0
        %448 = vmatpush1.bf16.msra.mxu0 0
        %449 = vmatprep.subr.bf16.mxu0 0
        %450 = vmatpush1.bf16.msra.mxu0 0
        %451 = vmatprep.subr.bf16.mxu0 0
        %452 = vmatpush1.bf16.msra.mxu0 0
        %453 = vmatprep.subr.bf16.mxu0 0
        %454 = vmatpush1.bf16.msra.mxu0 0
        %455 = vmatprep.subr.bf16.mxu0 0
        %456 = vmatpush1.bf16.msra.mxu0 0
        %457 = vmatprep.subr.bf16.mxu0 0
        %458 = vmatpush1.bf16.msra.mxu0 0
        %459 = vmatprep.subr.bf16.mxu0 0
        %460 = vmatpush1.bf16.msra.mxu0 0
        %461 = vmatprep.subr.bf16.mxu0 0
        %462 = vmatpush1.bf16.msra.mxu0 0
        %463 = vmatprep.subr.bf16.mxu0 0
        %464 = vmatpush1.bf16.msra.mxu0 0
        %465 = vmatprep.subr.bf16.mxu0 0
        %466 = vmatpush1.bf16.msra.mxu0 0
        %467 = vmatprep.subr.bf16.mxu0 0
        %468 = vmatpush1.bf16.msra.mxu0 0
        %469 = vmatprep.subr.bf16.mxu0 0
        %470 = vmatpush1.bf16.msra.mxu0 0
        %471 = vmatprep.mubr.bf16.mxu0 0
        %472 = vmatmul.mubr.bf16.gmra.mrb[0].mxu0 %v430
        %v473 = vpop.f32.mrb[0].mxu0
        %v474 = vadd.f32 %v426, %v473
        %v475 = vpop.f32.mrb[0].mxu0
        %v476 = vadd.f32 %v426, %v475
        %v477 = vpop.f32.mrb[0].mxu0
        %v478 = vpop.f32.mrb[0].mxu0
        %479 = vdwg.mxu0
        %vm480 = vcmp.ge.f32.partialorder %v474, 0.0
        %vm481 = vcmp.ge.f32.partialorder %v476, 0.0
        %v482 = vmul.f32 %v474, 0.2
        %v483 = vmul.f32 %v476, 0.2
        %v484 = vsel %vm480, %v474, %v482
        %v485 = vsel %vm481, %v476, %v483
        %v486 = vld [vmem:[%s5] sm:$0xf]
        %v487 = vld [vmem:[%s5 + $0x4] sm:$0xf]
        %v488 = vpack.c.bf16 %v484, %v484
        %v489 = vpack.c.bf16 %v485, %v485
        %v490 = vld [vmem:[%s6] sm:$0xff]
        %v491 = vld [vmem:[%s6 + $0x8] sm:$0xff]
        %493 = vset.pattern.permute.xlu0 0
        %494 = vperm.xlu0 %493, %v490
        %v495 = vpop.permute.xlu0 %494
        %498 = vset.pattern.permute.xlu0 0
        %499 = vperm.xlu0 %498, %v491
        %v500 = vpop.permute.xlu0 %499
        %v504 = vunpack.c.l.b16 %v486
        %v505 = vunpack.c.l.b16 %v487
        %v506 = vpack.c.b16 %v505, %v504
        %v508 = vsel %vm428, %v506, 0
        %v511 = vsel %vm432, %v488, 0
        %v514 = vsel %vm432, %v489, 0
        %516 = vmatprep.subr.bf16.mxu0 %v514
        %517 = vmatpush1.bf16.msra.mxu0 %v511
        %518 = vmatprep.subr.bf16.mxu0 0
        %519 = vmatpush1.bf16.msra.mxu0 0
        %520 = vmatprep.subr.bf16.mxu0 0
        %521 = vmatpush1.bf16.msra.mxu0 0
        %522 = vmatprep.subr.bf16.mxu0 0
        %523 = vmatpush1.bf16.msra.mxu0 0
        %524 = vmatprep.subr.bf16.mxu0 0
        %525 = vmatpush1.bf16.msra.mxu0 0
        %526 = vmatprep.subr.bf16.mxu0 0
        %527 = vmatpush1.bf16.msra.mxu0 0
        %528 = vmatprep.subr.bf16.mxu0 0
        %529 = vmatpush1.bf16.msra.mxu0 0
        %530 = vmatprep.subr.bf16.mxu0 0
        %531 = vmatpush1.bf16.msra.mxu0 0
        %532 = vmatprep.subr.bf16.mxu0 0
        %533 = vmatpush1.bf16.msra.mxu0 0
        %534 = vmatprep.subr.bf16.mxu0 0
        %535 = vmatpush1.bf16.msra.mxu0 0
        %536 = vmatprep.subr.bf16.mxu0 0
        %537 = vmatpush1.bf16.msra.mxu0 0
        %538 = vmatprep.subr.bf16.mxu0 0
        %539 = vmatpush1.bf16.msra.mxu0 0
        %540 = vmatprep.subr.bf16.mxu0 0
        %541 = vmatpush1.bf16.msra.mxu0 0
        %542 = vmatprep.subr.bf16.mxu0 0
        %543 = vmatpush1.bf16.msra.mxu0 0
        %544 = vmatprep.subr.bf16.mxu0 0
        %545 = vmatpush1.bf16.msra.mxu0 0
        %546 = vmatprep.subr.bf16.mxu0 0
        %547 = vmatpush1.bf16.msra.mxu0 0
        %548 = vmatprep.mubr.bf16.mxu0 0
        %549 = vmatmul.mubr.bf16.gmra.mrb[0].mxu0 %v508
        %v550 = vpop.f32.mrb[0].mxu0
        %v551 = vadd.f32 %v495, %v550
        %v552 = vpop.f32.mrb[0].mxu0
        %v553 = vadd.f32 %v495, %v552
        %v554 = vpop.f32.mrb[0].mxu0
        %v555 = vadd.f32 %v500, %v554
        %v556 = vpop.f32.mrb[0].mxu0
        %v557 = vadd.f32 %v500, %v556
        %558 = vdwg.mxu0
        %v559 = vadd.f32 %v551, %v401
        %v560 = vadd.f32 %v553, %v403
        %v561 = vadd.f32 %v555, %v407
        %v562 = vadd.f32 %v557, %v409
        %vm563 = vcmp.ge.f32.partialorder %v559, 0.0
        %vm564 = vcmp.ge.f32.partialorder %v560, 0.0
        %vm565 = vcmp.ge.f32.partialorder %v561, 0.0
        %vm566 = vcmp.ge.f32.partialorder %v562, 0.0
        %v567 = vmul.f32 %v559, 0.2
        %v568 = vmul.f32 %v560, 0.2
        %v569 = vmul.f32 %v561, 0.2
        %v570 = vmul.f32 %v562, 0.2
        %v571 = vsel %vm563, %v559, %v567
        %v572 = vsel %vm564, %v560, %v568
        %v573 = vsel %vm565, %v561, %v569
        %v574 = vsel %vm566, %v562, %v570
        %575 = vst [vmem:[%s296] sm:$0xff] %v571
        %576 = vst [vmem:[%s296 + $0x8] sm:$0xff] %v572
        %577 = vst [vmem:[%s296 + $0x10] sm:$0xff] %v573
        %578 = vst [vmem:[%s296 + $0x18] sm:$0xff] %v574
        %s579 = sand.u32 %s197, 1
        %s580 = scalar_lea.sflag [#allocation3], %s579
        %s581 = sand.u32 %s197, 1
        %s582 = smul.addr %s581, 32
        %s583 = scalar_lea.vmem [#allocation2], %s582
        // Predicated region
        $region49: #{tpu_custom_call.1} parent=47 // pred_check
          %p584 = pneg %p207
        $region50: #{tpu_custom_call.1} parent=47 // pred_check_branch
          %586 = sbr.rel (%p584) target = $region52
        $region51: #{tpu_custom_call.1} parent=47 // pred_region
          %s587 = smul.u32 2, %s26
          %s589 = ssub.s32 512, 512
          %590 = vsyncadd %s580, %s589
          %s591 = smul.addr %s25, 8
          %s592 = sadd.s32 %s587, %s591
          %s593 = smul.addr %s592, 128
          %s594 = scalar_lea.hbm %s7, %s593
          %s595 = sshll.u32 %s583, 4
          %s596 = int_to_ptr.vmem [resolvable:$true] %s595
          %601 = dma.vmem_to_hbm [thread:$0]  %s596, 512, %s594, %s580, 256, 512, 16
        $region52: #{tpu_custom_call.1} parent=47 // pred_fallthru
          _
      $region48: #{tpu_custom_call.1} parent=5 // pred_fallthru
        _
      %p602 = scmp.le.s32.totalorder 2, %s16
      // Predicated region
      $region53: #{tpu_custom_call.1} parent=5 // pred_check
        %p603 = pneg %p602
      $region54: #{tpu_custom_call.1} parent=5 // pred_check_branch
        %605 = sbr.rel (%p603) target = $region56
      $region55: #{tpu_custom_call.1} parent=5 // pred_region
        %s606 = ssub.s32 %s16, 2
        // Predicated region
        $region57: #{tpu_custom_call.1} parent=55 // pred_check
          %p607 = pneg %p213
        $region58: #{tpu_custom_call.1} parent=55 // pred_check_branch
          %609 = sbr.rel (%p607) target = $region60
        $region59: #{tpu_custom_call.1} parent=55 // pred_region
          %s610 = sand.u32 %s198, 1
          %s611 = scalar_lea.sflag [#allocation3], %s610
          %s612 = sand.u32 %s198, 1
          %s613 = smul.addr %s612, 32
          %s614 = scalar_lea.vmem [#allocation2], %s613
          %615 = dma.done %s611, 512
        $region60: #{tpu_custom_call.1} parent=55 // pred_fallthru
          _
      $region56: #{tpu_custom_call.1} parent=5 // pred_fallthru
        _
    $region6: #{tpu_custom_call.1} parent=1 // loop_footer
      %s20 = sadd.s32 1, %s16
    $region7: #{tpu_custom_call.1} parent=1 // loop_footer_branch
      %15 = sbr.rel target = $region3
    $region8: #{tpu_custom_call.1} parent=1 // loop_exit
      _
    %616 = vsyncpa [#allocation3], 1
    %s617 = scalar_lea.sflag [#allocation3], 1
    %618 = vsyncpa %s617, 1

</llo_original>
